<compile_context>
chip_gen: v6e
topology: v6e:2x2x1
jax: 0.10.0
libtpu: 0.0.40
codegen_flags: <defaults>
</compile_context>

<pallas_src>
import functools

import jax
import jax.numpy as jnp
from jax import lax
from jax.experimental import pallas as pl
from jax.experimental.pallas import tpu as pltpu


def _texture_attn_kernel(x_ref, pos_ref, wq_ref, wkv_ref, wo_ref, bo_ref, o_ref,
                         kv_ref, o_all_ref, *, heads, dim_head, q_tile):
    """One grid step = one (batch, query-tile) pair; all heads fused.

    x_ref, pos_ref : (C, HW) f32   token row / positional row (resident per batch)
    wq_ref  : (H*D, C)   bf16      Q weights (softmax scale pre-folded)
    wkv_ref : (2*H*D, C) bf16      concatenated K|V weights
    wo_ref  : (C, H*D)   bf16      output projection weights
    bo_ref  : (C, 1)     f32       output projection bias
    o_ref   : (C, TQ)              output tile (lane-dense store)
    kv_ref  : (2*H*D, HW) bf16     VMEM scratch, K|V rows, persists across qi
    o_all_ref : (H*D, TQ) bf16     VMEM scratch, per-head outputs fed to Wo
    """
    inner = heads * dim_head
    qi = pl.program_id(1)

    # K|V projection + full-row pos-add computed once per batch row and cached
    # in bf16 VMEM scratch; all query tiles of this batch reuse it.
    @pl.when(qi == 0)
    def _():
        xp_kv = (x_ref[...] + pos_ref[...]).astype(jnp.bfloat16)          # (C, HW)
        kv_ref[...] = jnp.dot(wkv_ref[...], xp_kv,
                              preferred_element_type=jnp.float32
                              ).astype(jnp.bfloat16)                      # (2*inner, HW)

    # Query tile: 128-aligned in-kernel lane slice of the resident row
    # (no separate x_q / pos_q DMA streams).
    start = qi * q_tile
    if q_tile % 128 == 0:
        start = pl.multiple_of(start, 128)
    xp_q = (x_ref[:, pl.ds(start, q_tile)] +
            pos_ref[:, pl.ds(start, q_tile)]).astype(jnp.float32)         # (C, TQ)

    q = jnp.dot(wq_ref[...], xp_q.astype(jnp.bfloat16),
                preferred_element_type=jnp.float32)                       # (inner, TQ)

    # TODO(synk): for heads >= ~4 with multi-MiB (HW, TQ) tiles, switch this
    # static unroll to lax.fori_loop to bound live ranges / vreg pressure.
    for h in range(heads):
        lo = h * dim_head
        q_h = q[lo:lo + dim_head, :].astype(jnp.bfloat16)                 # (D, TQ)
        k_h = kv_ref[lo:lo + dim_head, :]                                 # (D, HW) bf16
        v_h = kv_ref[inner + lo:inner + lo + dim_head, :]                 # (D, HW) bf16

        # Scores with keys on sublanes, queries on lanes:
        # s[j, i] = sum_d k[d, j] * q[d, i]   (scale already folded into Wq)
        s = lax.dot_general(k_h, q_h, (((0,), (0,)), ((), ())),
                            preferred_element_type=jnp.float32)           # (HW, TQ)
        s = s - jnp.max(s, axis=0, keepdims=True)
        # TODO(synk): on v6e/v7x a bf16 exp roughly doubles EUP throughput;
        # kept f32 here so the same kernel stays exact-enough on v5e.
        p = jnp.exp(s)
        l = jnp.sum(p, axis=0, keepdims=True)                             # (1, TQ) f32

        # Unnormalised attention output on the MXU (bf16 x bf16 -> f32),
        # then one small (D, TQ) scale by the EUP approximate reciprocal.
        o_h = jnp.dot(v_h, p.astype(jnp.bfloat16),
                      preferred_element_type=jnp.float32)                 # (D, TQ)
        o_h = o_h * pl.reciprocal(l, approx=True)
        o_all_ref[lo:lo + dim_head, :] = o_h.astype(jnp.bfloat16)

    # Fused output projection + bias + residual (residual is x + pos, matching
    # the PyTorch module: `return out + x` after `x = x + pos_enc`).
    out = jnp.dot(wo_ref[...], o_all_ref[...],
                  preferred_element_type=jnp.float32)                     # (C, TQ)
    out = out + bo_ref[...] + xp_q
    o_ref[...] = out.astype(o_ref.dtype)


def _vmem_capacity_bytes():
    try:
        return int(pltpu.get_tpu_info().vmem_capacity_bytes)
    except Exception:
        return 64 * 1024 * 1024   # conservative default (v7x-sized)


def _working_set_bytes(C, HW, TQ, inner):
    """Rough VMEM working-set estimate for one grid step."""
    resident = 4 * 2 * (2 * C * HW)                  # x + pos rows (f32, double-buffered)
    resident += 2 * (2 * inner * HW)                 # kv scratch (bf16)
    resident += 2 * 2 * (4 * inner * C + C)          # bf16 weights (double-buffered)
    per_step = 4 * (2 * HW * TQ)                     # score + prob tiles (f32)
    per_step += 4 * (2 * inner * TQ) + 2 * inner * TQ  # q / o_h temps + o_all scratch
    per_step += 4 * (4 * C * TQ)                     # xp_q + out + double-buffered output
    return resident + per_step


def _pick_q_tile(C, HW, inner, vmem_cap):
    """Generation-aware query tile: largest tile whose working set fits."""
    budget = int(0.70 * vmem_cap)
    if HW <= 1024 and _working_set_bytes(C, HW, HW, inner) <= budget:
        return HW
    cands = [t for t in (1024, 512, 256, 128) if t < HW and HW % t == 0]
    for t in cands:
        if _working_set_bytes(C, HW, t, inner) <= budget:
            return t
    # TODO(synk): flash-style online-softmax KV tiling for shapes where even
    # TQ=128 does not fit (HW >~ 4k on v7x with large C / inner).
    return cands[-1] if cands else HW


def _vmem_limit_bytes(C, HW, TQ, inner, vmem_cap):
    # Never request the full physical VMEM (critical on v7x where 64 MiB is
    # everything); leave ~15% headroom for compiler-internal scratch.
    cap = int(0.85 * vmem_cap)
    est = int(1.5 * _working_set_bytes(C, HW, TQ, inner))
    return max(32 * 1024 * 1024, min(cap, est))


def texture_attention_pallas(x_tok, pos_tok, wq_scaled, wkv, wo, bo, *,
                             heads, dim_head, q_tile=None):
    """x_tok: (B, C, HW) channel-major tokens; pos_tok: (1, C, HW). Returns (B, C, HW)."""
    B, C, HW = x_tok.shape
    inner = heads * dim_head
    vmem_cap = _vmem_capacity_bytes()
    TQ = q_tile if q_tile is not None else _pick_q_tile(C, HW, inner, vmem_cap)
    assert HW % TQ == 0
    num_q = HW // TQ

    # bf16 weights: native MXU rate + half the weight DMA / VMEM footprint.
    # (In production, store them in bf16 once instead of casting per call.)
    wq_bf16 = wq_scaled.astype(jnp.bfloat16)
    wkv_bf16 = wkv.astype(jnp.bfloat16)
    wo_bf16 = wo.astype(jnp.bfloat16)

    kernel = functools.partial(_texture_attn_kernel,
                               heads=heads, dim_head=dim_head, q_tile=TQ)

    return pl.pallas_call(
        kernel,
        out_shape=jax.ShapeDtypeStruct((B, C, HW), x_tok.dtype),
        grid_spec=pltpu.PrefetchScalarGridSpec(
            num_scalar_prefetch=0,
            grid=(B, num_q),
            in_specs=[
                # Full token / positional rows, resident across query tiles of
                # a batch (block index does not change with qi).
                # TODO(synk): pipeline_mode=pl.Buffered(1) on these and on the
                # weight blocks would halve their VMEM footprint.
                pl.BlockSpec((None, C, HW), lambda b, qi: (b, 0, 0)),
                pl.BlockSpec((None, C, HW), lambda b, qi: (0, 0, 0)),
                # Small resident full-array weight blocks (bf16).
                pl.BlockSpec((inner, C), lambda b, qi: (0, 0)),       # Wq (scaled)
                pl.BlockSpec((2 * inner, C), lambda b, qi: (0, 0)),   # Wk|Wv fused
                pl.BlockSpec((C, inner), lambda b, qi: (0, 0)),       # Wo
                pl.BlockSpec((C, 1), lambda b, qi: (0, 0)),           # bias
            ],
            out_specs=pl.BlockSpec((None, C, TQ), lambda b, qi: (b, 0, qi)),
            scratch_shapes=[
                pltpu.VMEM((2 * inner, HW), jnp.bfloat16),  # cached K|V projection
                pltpu.VMEM((inner, TQ), jnp.bfloat16),      # per-head outputs
            ],
        ),
        # qi carries the cached K|V scratch -> must be "arbitrary"; batch stays
        # "parallel" for megacore.
        # TODO(synk): on v7x with B == 1, split the query axis into an outer
        # parallel axis (each core recomputes kv once) to keep both TCs busy.
        compiler_params=pltpu.CompilerParams(
            dimension_semantics=("parallel", "arbitrary"),
            vmem_limit_bytes=_vmem_limit_bytes(C, HW, TQ, inner, vmem_cap),
        ),
    )(x_tok, pos_tok, wq_bf16, wkv_bf16, wo_bf16, bo)


def init_params(key, in_channels, heads, dim_head):
    """Deterministic synthetic parameters in the kernel's layout.

    Conv2d(1x1) weights of shape (out, in, 1, 1) are stored as their (out, in)
    matmul equivalents, which is exactly the channel-major kernel layout.
    """
    inner = heads * dim_head
    scale = dim_head ** (-0.5)
    k1, k2, k3, k4, k5, k6 = jax.random.split(key, 6)
    wq = 0.1 * jax.random.normal(k1, (inner, in_channels), jnp.float32)
    wk = 0.1 * jax.random.normal(k2, (inner, in_channels), jnp.float32)
    wv = 0.1 * jax.random.normal(k3, (inner, in_channels), jnp.float32)
    wo = 0.1 * jax.random.normal(k4, (in_channels, inner), jnp.float32)
    bo = 0.1 * jax.random.normal(k5, (in_channels,), jnp.float32)
    pos_enc = jax.random.normal(k6, (1, in_channels, 32, 32), jnp.float32)
    return {
        "heads": heads,
        "dim_head": dim_head,
        "wq_scaled": wq * scale,                    # softmax scale folded into Wq
        "wkv": jnp.concatenate([wk, wv], axis=0),   # (2*inner, C) fused K|V weights
        "wo": wo,                                   # (C, inner)
        "bo": bo.reshape(in_channels, 1),           # broadcast over lanes in-kernel
        "pos_enc": pos_enc,
    }


def resize_pos_enc(params, H, W):
    """Hoisted (constant per resolution): bilinear, half-pixel centers
    (== F.interpolate(mode='bilinear', align_corners=False))."""
    C = params["pos_enc"].shape[1]
    pos = jax.image.resize(params["pos_enc"], (1, C, H, W),
                           method="bilinear", antialias=False)
    return pos.reshape(1, C, H * W)


def texture_attention_forward(x, params, pos_tok=None):
    """x: NCHW (B, C, H, W), same convention as the PyTorch module."""
    B, C, H, W = x.shape
    if pos_tok is None:
        pos_tok = resize_pos_enc(params, H, W)
    x_tok = x.reshape(B, C, H * W)           # channel-major tokens: reshape only
    out_tok = texture_attention_pallas(
        x_tok, pos_tok,
        params["wq_scaled"], params["wkv"], params["wo"], params["bo"],
        heads=params["heads"], dim_head=params["dim_head"],
    )
    # TODO(synk): nn.Dropout(p=0.1) in to_out is identity at inference; not modeled.
    return out_tok.reshape(B, C, H, W)


def texture_attention_reference(x, params):
    """Pure-JAX reference mirroring the PyTorch module (f32 throughout)."""
    B, C, H, W = x.shape
    heads, D = params["heads"], params["dim_head"]
    inner = heads * D
    pos = jax.image.resize(params["pos_enc"], (1, C, H, W),
                           method="bilinear", antialias=False)
    xt = (x + pos).reshape(B, C, H * W)
    wq = params["wq_scaled"]
    wk = params["wkv"][:inner]
    wv = params["wkv"][inner:]
    q = jnp.einsum("oc,bcn->bon", wq, xt).reshape(B, heads, D, -1)
    k = jnp.einsum("oc,bcn->bon", wk, xt).reshape(B, heads, D, -1)
    v = jnp.einsum("oc,bcn->bon", wv, xt).reshape(B, heads, D, -1)
    att = jax.nn.softmax(jnp.einsum("bhdi,bhdj->bhij", q, k), axis=-1)
    o = jnp.einsum("bhij,bhdj->bhdi", att, v).reshape(B, inner, -1)
    out = jnp.einsum("ck,bkn->bcn", params["wo"], o) + params["bo"][None]
    return (out + xt).reshape(B, C, H, W)


if __name__ == "__main__":
    B, C, H, W = 2, 8, 16, 16
    heads, dim_head = 2, 8

    key = jax.random.PRNGKey(0)
    k_x, k_p = jax.random.split(key)
    x = jax.random.normal(k_x, (B, C, H, W), jnp.float32)
    params = init_params(k_p, C, heads, dim_head)

    pos_tok = resize_pos_enc(params, H, W)        # hoisted: constant per (H, W)
    out = texture_attention_forward(x, params, pos_tok=pos_tok)
    jax.block_until_ready(out)
    assert out.shape == (B, C, H, W)

    ref = texture_attention_reference(x, params)
    max_err = float(jnp.max(jnp.abs(out - ref)))
    assert max_err < 2e-2, f"mismatch vs reference: {max_err}"

    print("KERNEL_OK")
</pallas_src>

<mosaic_0001>
module attributes {stable_mosaic.version = 11 : i64} {
  func.func @_texture_attn_kernel(%arg0: i32, %arg1: i32, %arg2: memref<1x8x256xf32, #tpu.memory_space<vmem>>, %arg3: memref<1x8x256xf32, #tpu.memory_space<vmem>>, %arg4: memref<16x8xbf16, #tpu.memory_space<vmem>>, %arg5: memref<32x8xbf16, #tpu.memory_space<vmem>>, %arg6: memref<8x16xbf16, #tpu.memory_space<vmem>>, %arg7: memref<8x1xf32, #tpu.memory_space<vmem>>, %arg8: memref<1x8x256xf32, #tpu.memory_space<vmem>>, %arg9: memref<32x256xbf16, #tpu.memory_space<vmem>>, %arg10: memref<16x256xbf16, #tpu.memory_space<vmem>>) attributes {dimension_semantics = [#tpu.dimension_semantics<parallel>, #tpu.dimension_semantics<arbitrary>], iteration_bounds = array<i64: 2, 1>, scalar_prefetch = 0 : i64, scratch_operands = 2 : i64, tpu.core_type = #tpu.core_type<tc>, window_params = [{transform_indices = @transform_0, window_bounds = array<i64: 1, 8, 256>}, {pipeline_mode = #tpu.pipeline_mode<synchronous>, transform_indices = @transform_1, window_bounds = array<i64: 1, 8, 256>}, {pipeline_mode = #tpu.pipeline_mode<synchronous>, transform_indices = @transform_2, window_bounds = array<i64: 16, 8>}, {pipeline_mode = #tpu.pipeline_mode<synchronous>, transform_indices = @transform_3, window_bounds = array<i64: 32, 8>}, {pipeline_mode = #tpu.pipeline_mode<synchronous>, transform_indices = @transform_4, window_bounds = array<i64: 8, 16>}, {pipeline_mode = #tpu.pipeline_mode<synchronous>, transform_indices = @transform_5, window_bounds = array<i64: 8, 1>}, {transform_indices = @transform_6, window_bounds = array<i64: 1, 8, 256>}]} {
    %c0_i32 = arith.constant 0 : i32
    %0 = arith.cmpi eq, %arg1, %c0_i32 : i32
    %1 = arith.extui %0 : i1 to i32
    %c0_i32_0 = arith.constant 0 : i32
    %2 = arith.cmpi ne, %1, %c0_i32_0 : i32
    scf.if %2 {
      %c0_33 = arith.constant 0 : index
      %c0_34 = arith.constant 0 : index
      %c0_35 = arith.constant 0 : index
      %63 = vector.load %arg2[%c0_33, %c0_34, %c0_35] : memref<1x8x256xf32, #tpu.memory_space<vmem>>, vector<1x8x256xf32>
      %64 = vector.shape_cast %63 : vector<1x8x256xf32> to vector<8x256xf32>
      %c0_36 = arith.constant 0 : index
      %c0_37 = arith.constant 0 : index
      %c0_38 = arith.constant 0 : index
      %65 = vector.load %arg3[%c0_36, %c0_37, %c0_38] : memref<1x8x256xf32, #tpu.memory_space<vmem>>, vector<1x8x256xf32>
      %66 = vector.shape_cast %65 : vector<1x8x256xf32> to vector<8x256xf32>
      %67 = arith.addf %64, %66 : vector<8x256xf32>
      %68 = arith.truncf %67 : vector<8x256xf32> to vector<8x256xbf16>
      %c0_39 = arith.constant 0 : index
      %c0_40 = arith.constant 0 : index
      %69 = vector.load %arg5[%c0_39, %c0_40] : memref<32x8xbf16, #tpu.memory_space<vmem>>, vector<32x8xbf16>
      %cst_41 = arith.constant dense<0.000000e+00> : vector<32x256xf32>
      %70 = tpu.matmul %69, %68, %cst_41 {dimension_numbers = #tpu.dot_dimension_numbers<[1], [0], [0], [1], [0, 0, 1, 1], [], []>} : vector<32x8xbf16>, vector<8x256xbf16>, vector<32x256xf32> -> vector<32x256xf32>
      %71 = arith.truncf %70 : vector<32x256xf32> to vector<32x256xbf16>
      %c0_42 = arith.constant 0 : index
      %c0_43 = arith.constant 0 : index
      %72 = vector.load %arg9[%c0_42, %c0_43] : memref<32x256xbf16, #tpu.memory_space<vmem>>, vector<32x256xbf16>
      tpu.vector_store %arg9[%c0_42, %c0_43], %71 {strides = array<i32>} : memref<32x256xbf16, #tpu.memory_space<vmem>>, vector<32x256xbf16>,
    } else {
    }
    %c256_i32 = arith.constant 256 : i32
    %3 = arith.muli %arg1, %c256_i32 : i32
    %4 = tpu.assume_multiple %3, 128 : i32
    %c0 = arith.constant 0 : index
    %c0_1 = arith.constant 0 : index
    %5 = arith.index_cast %4 : i32 to index
    %6 = vector.load %arg2[%c0, %c0_1, %5] : memref<1x8x256xf32, #tpu.memory_space<vmem>>, vector<1x8x256xf32>
    %7 = vector.shape_cast %6 : vector<1x8x256xf32> to vector<8x256xf32>
    %c0_2 = arith.constant 0 : index
    %c0_3 = arith.constant 0 : index
    %8 = arith.index_cast %4 : i32 to index
    %9 = vector.load %arg3[%c0_2, %c0_3, %8] : memref<1x8x256xf32, #tpu.memory_space<vmem>>, vector<1x8x256xf32>
    %10 = vector.shape_cast %9 : vector<1x8x256xf32> to vector<8x256xf32>
    %11 = arith.addf %7, %10 : vector<8x256xf32>
    %c0_4 = arith.constant 0 : index
    %c0_5 = arith.constant 0 : index
    %12 = vector.load %arg4[%c0_4, %c0_5] : memref<16x8xbf16, #tpu.memory_space<vmem>>, vector<16x8xbf16>
    %13 = arith.truncf %11 : vector<8x256xf32> to vector<8x256xbf16>
    %cst = arith.constant dense<0.000000e+00> : vector<16x256xf32>
    %14 = tpu.matmul %12, %13, %cst {dimension_numbers = #tpu.dot_dimension_numbers<[1], [0], [0], [1], [0, 0, 1, 1], [], []>} : vector<16x8xbf16>, vector<8x256xbf16>, vector<16x256xf32> -> vector<16x256xf32>
    %15 = vector.extract_strided_slice %14 {offsets = [0, 0], sizes = [8, 256], strides = [1, 1]} : vector<16x256xf32> to vector<8x256xf32>
    %16 = arith.truncf %15 : vector<8x256xf32> to vector<8x256xbf16>
    %c0_6 = arith.constant 0 : index
    %c0_7 = arith.constant 0 : index
    %17 = vector.load %arg9[%c0_6, %c0_7] : memref<32x256xbf16, #tpu.memory_space<vmem>>, vector<8x256xbf16>
    %c16 = arith.constant 16 : index
    %c0_8 = arith.constant 0 : index
    %18 = vector.load %arg9[%c16, %c0_8] : memref<32x256xbf16, #tpu.memory_space<vmem>>, vector<8x256xbf16>
    %cst_9 = arith.constant dense<0.000000e+00> : vector<256x256xf32>
    %19 = tpu.matmul %17, %16, %cst_9 {dimension_numbers = #tpu.dot_dimension_numbers<[0], [0], [1], [1], [0, 1, 1, 1], [], []>} : vector<8x256xbf16>, vector<8x256xbf16>, vector<256x256xf32> -> vector<256x256xf32>
    %cst_10 = arith.constant dense<0xFF800000> : vector<256xf32>
    %20 = vector.multi_reduction <maximumf>, %19, %cst_10 [0] : vector<256x256xf32> to vector<256xf32>
    %21 = vector.shape_cast %20 : vector<256xf32> to vector<1x256xf32>
    %22 = vector.broadcast %21 : vector<1x256xf32> to vector<256x256xf32>
    %23 = arith.subf %19, %22 : vector<256x256xf32>
    %24 = math.exp %23 : vector<256x256xf32>
    %cst_11 = arith.constant dense<0.000000e+00> : vector<256xf32>
    %25 = vector.multi_reduction <add>, %24, %cst_11 [0] : vector<256x256xf32> to vector<256xf32>
    %26 = vector.shape_cast %25 : vector<256xf32> to vector<1x256xf32>
    %27 = arith.truncf %24 : vector<256x256xf32> to vector<256x256xbf16>
    %cst_12 = arith.constant dense<0.000000e+00> : vector<8x256xf32>
    %28 = tpu.matmul %18, %27, %cst_12 {dimension_numbers = #tpu.dot_dimension_numbers<[1], [0], [0], [1], [0, 0, 1, 1], [], []>} : vector<8x256xbf16>, vector<256x256xbf16>, vector<8x256xf32> -> vector<8x256xf32>
    %29 = tpu.reciprocal %26 {approx = true} : vector<1x256xf32> -> vector<1x256xf32>
    %30 = vector.broadcast %29 : vector<1x256xf32> to vector<8x256xf32>
    %31 = arith.mulf %28, %30 : vector<8x256xf32>
    %32 = arith.truncf %31 : vector<8x256xf32> to vector<8x256xbf16>
    %c0_13 = arith.constant 0 : index
    %c0_14 = arith.constant 0 : index
    %33 = vector.load %arg10[%c0_13, %c0_14] : memref<16x256xbf16, #tpu.memory_space<vmem>>, vector<8x256xbf16>
    tpu.vector_store %arg10[%c0_13, %c0_14], %32 {strides = array<i32>} : memref<16x256xbf16, #tpu.memory_space<vmem>>, vector<8x256xbf16>,
    %34 = vector.extract_strided_slice %14 {offsets = [8, 0], sizes = [8, 256], strides = [1, 1]} : vector<16x256xf32> to vector<8x256xf32>
    %35 = arith.truncf %34 : vector<8x256xf32> to vector<8x256xbf16>
    %c8 = arith.constant 8 : index
    %c0_15 = arith.constant 0 : index
    %36 = vector.load %arg9[%c8, %c0_15] : memref<32x256xbf16, #tpu.memory_space<vmem>>, vector<8x256xbf16>
    %c24 = arith.constant 24 : index
    %c0_16 = arith.constant 0 : index
    %37 = vector.load %arg9[%c24, %c0_16] : memref<32x256xbf16, #tpu.memory_space<vmem>>, vector<8x256xbf16>
    %cst_17 = arith.constant dense<0.000000e+00> : vector<256x256xf32>
    %38 = tpu.matmul %36, %35, %cst_17 {dimension_numbers = #tpu.dot_dimension_numbers<[0], [0], [1], [1], [0, 1, 1, 1], [], []>} : vector<8x256xbf16>, vector<8x256xbf16>, vector<256x256xf32> -> vector<256x256xf32>
    %cst_18 = arith.constant dense<0xFF800000> : vector<256xf32>
    %39 = vector.multi_reduction <maximumf>, %38, %cst_18 [0] : vector<256x256xf32> to vector<256xf32>
    %40 = vector.shape_cast %39 : vector<256xf32> to vector<1x256xf32>
    %41 = vector.broadcast %40 : vector<1x256xf32> to vector<256x256xf32>
    %42 = arith.subf %38, %41 : vector<256x256xf32>
    %43 = math.exp %42 : vector<256x256xf32>
    %cst_19 = arith.constant dense<0.000000e+00> : vector<256xf32>
    %44 = vector.multi_reduction <add>, %43, %cst_19 [0] : vector<256x256xf32> to vector<256xf32>
    %45 = vector.shape_cast %44 : vector<256xf32> to vector<1x256xf32>
    %46 = arith.truncf %43 : vector<256x256xf32> to vector<256x256xbf16>
    %cst_20 = arith.constant dense<0.000000e+00> : vector<8x256xf32>
    %47 = tpu.matmul %37, %46, %cst_20 {dimension_numbers = #tpu.dot_dimension_numbers<[1], [0], [0], [1], [0, 0, 1, 1], [], []>} : vector<8x256xbf16>, vector<256x256xbf16>, vector<8x256xf32> -> vector<8x256xf32>
    %48 = tpu.reciprocal %45 {approx = true} : vector<1x256xf32> -> vector<1x256xf32>
    %49 = vector.broadcast %48 : vector<1x256xf32> to vector<8x256xf32>
    %50 = arith.mulf %47, %49 : vector<8x256xf32>
    %51 = arith.truncf %50 : vector<8x256xf32> to vector<8x256xbf16>
    %c8_21 = arith.constant 8 : index
    %c0_22 = arith.constant 0 : index
    %52 = vector.load %arg10[%c8_21, %c0_22] : memref<16x256xbf16, #tpu.memory_space<vmem>>, vector<8x256xbf16>
    tpu.vector_store %arg10[%c8_21, %c0_22], %51 {strides = array<i32>} : memref<16x256xbf16, #tpu.memory_space<vmem>>, vector<8x256xbf16>,
    %c0_23 = arith.constant 0 : index
    %c0_24 = arith.constant 0 : index
    %53 = vector.load %arg6[%c0_23, %c0_24] : memref<8x16xbf16, #tpu.memory_space<vmem>>, vector<8x16xbf16>
    %c0_25 = arith.constant 0 : index
    %c0_26 = arith.constant 0 : index
    %54 = vector.load %arg10[%c0_25, %c0_26] : memref<16x256xbf16, #tpu.memory_space<vmem>>, vector<16x256xbf16>
    %cst_27 = arith.constant dense<0.000000e+00> : vector<8x256xf32>
    %55 = tpu.matmul %53, %54, %cst_27 {dimension_numbers = #tpu.dot_dimension_numbers<[1], [0], [0], [1], [0, 0, 1, 1], [], []>} : vector<8x16xbf16>, vector<16x256xbf16>, vector<8x256xf32> -> vector<8x256xf32>
    %c0_28 = arith.constant 0 : index
    %c0_29 = arith.constant 0 : index
    %56 = vector.load %arg7[%c0_28, %c0_29] : memref<8x1xf32, #tpu.memory_space<vmem>>, vector<8x1xf32>
    %57 = vector.broadcast %56 : vector<8x1xf32> to vector<8x256xf32>
    %58 = arith.addf %55, %57 : vector<8x256xf32>
    %59 = arith.addf %58, %11 : vector<8x256xf32>
    %c0_30 = arith.constant 0 : index
    %c0_31 = arith.constant 0 : index
    %c0_32 = arith.constant 0 : index
    %60 = vector.load %arg8[%c0_30, %c0_31, %c0_32] : memref<1x8x256xf32, #tpu.memory_space<vmem>>, vector<1x8x256xf32>
    %61 = vector.shape_cast %60 : vector<1x8x256xf32> to vector<8x256xf32>
    %62 = vector.shape_cast %59 : vector<8x256xf32> to vector<1x8x256xf32>
    tpu.vector_store %arg8[%c0_30, %c0_31, %c0_32], %62 {strides = array<i32>} : memref<1x8x256xf32, #tpu.memory_space<vmem>>, vector<1x8x256xf32>,
    return
  }
  func.func @transform_0(%arg0: i32, %arg1: i32) -> (i32, i32, i32) {
    %c0_i32 = arith.constant 0 : i32
    %c0_i32_0 = arith.constant 0 : i32
    %c0_i32_1 = arith.constant 0 : i32
    return %arg0, %c0_i32, %c0_i32_0 : i32, i32, i32
  }
  func.func @transform_1(%arg0: i32, %arg1: i32) -> (i32, i32, i32) {
    %c0_i32 = arith.constant 0 : i32
    %c0_i32_0 = arith.constant 0 : i32
    %c0_i32_1 = arith.constant 0 : i32
    %c0_i32_2 = arith.constant 0 : i32
    return %c0_i32, %c0_i32_0, %c0_i32_1 : i32, i32, i32
  }
  func.func @transform_2(%arg0: i32, %arg1: i32) -> (i32, i32) {
    %c0_i32 = arith.constant 0 : i32
    %c0_i32_0 = arith.constant 0 : i32
    %c0_i32_1 = arith.constant 0 : i32
    return %c0_i32, %c0_i32_0 : i32, i32
  }
  func.func @transform_3(%arg0: i32, %arg1: i32) -> (i32, i32) {
    %c0_i32 = arith.constant 0 : i32
    %c0_i32_0 = arith.constant 0 : i32
    %c0_i32_1 = arith.constant 0 : i32
    return %c0_i32, %c0_i32_0 : i32, i32
  }
  func.func @transform_4(%arg0: i32, %arg1: i32) -> (i32, i32) {
    %c0_i32 = arith.constant 0 : i32
    %c0_i32_0 = arith.constant 0 : i32
    %c0_i32_1 = arith.constant 0 : i32
    return %c0_i32, %c0_i32_0 : i32, i32
  }
  func.func @transform_5(%arg0: i32, %arg1: i32) -> (i32, i32) {
    %c0_i32 = arith.constant 0 : i32
    %c0_i32_0 = arith.constant 0 : i32
    %c0_i32_1 = arith.constant 0 : i32
    return %c0_i32, %c0_i32_0 : i32, i32
  }
  func.func @transform_6(%arg0: i32, %arg1: i32) -> (i32, i32, i32) {
    %c0_i32 = arith.constant 0 : i32
    %c0_i32_0 = arith.constant 0 : i32
    return %arg0, %c0_i32, %arg1 : i32, i32, i32
  }
}

</mosaic_0001>

<llo_original>
// kernel: tpu_custom_call.1
$region0: #{tpu_custom_call.1}
  #allocation0 [shape = 'u32[]', space=smem, size = 0x4, offset = 0x4, fixed_abs, tag = 'smem constant byte address 0x4 - core index']
  #allocation1 [shape = 'u32[144,128]{1,0:T(1,128)}', space=vmem, size = 0x12000, scoped, tag = 'internal scratch']
  #allocation2 [shape = 'bf16[32,256]{1,0:T(8,128)(2,1)}', space=vmem, size = 0x4000, scoped, tag = 'scratch operand']
  #allocation3 [shape = 'bf16[16,256]{1,0:T(8,128)(2,1)}', space=vmem, size = 0x2000, scoped, tag = 'scratch operand']
  %s0 = inlined_call_operand.vmem [shape: f32[2,8,256], index: 0, kind: input, shape index: {}]
  %s1 = inlined_call_operand.hbm [shape: f32[1,8,256], index: 1, kind: input, shape index: {}]
  %s2 = inlined_call_operand.vmem [shape: bf16[16,8], index: 2, kind: input, shape index: {}]
  %s3 = inlined_call_operand.vmem [shape: bf16[32,8], index: 3, kind: input, shape index: {}]
  %s4 = inlined_call_operand.vmem [shape: bf16[8,16], index: 4, kind: input, shape index: {}]
  %s5 = inlined_call_operand.vmem [shape: f32[8,1], index: 5, kind: input, shape index: {}]
  %s6 = inlined_call_operand.hbm [shape: f32[2,8,256], index: 6, kind: output, shape index: {}]
  %s7 = sld [smem:[#allocation0]]
  $region65: #{tpu_custom_call.1} parent=0
    _
  %s9 = ssub.s32 1, %s7
  %s10 = scalar_select 0, %s9, %s7
  $region1: #{tpu_custom_call.1} parent=0
    #allocation4 [shape = 'u8[8192]{0}', space=vmem, size = 0x2000, scoped, tag = 'input window, operand 1, single buffered']
    #allocation5 [shape = 's32[2]{0}', space=sflag, size = 0x8, scoped, tag = 'scoped memory for tpu_custom_call.1']
    #allocation6 [shape = 's32[2]{0}', space=sflag, size = 0x8, scoped, tag = 'scoped memory for tpu_custom_call.1']
    #allocation7 [shape = 'u8[16384]{0}', space=vmem, size = 0x4000, scoped, tag = 'output window, operand 0']
    %11 = vsyncpa [#allocation5], 0
    %12 = vsyncpa [#allocation6], 0
    %s13 = scalar_lea.sflag [#allocation6], 1
    %14 = vsyncpa %s13, 0
    loop: start=0, step=1, limit=4
    $region2: #{tpu_custom_call.1} parent=1 // loop_pre_header
      _
    $region3: #{tpu_custom_call.1} parent=1 // loop_header
      %s16 = sphi 0, %s20
      %p17 = scmp.ge.s32.totalorder %s16, 4
      %s23 = sphi 0, %s35
      %s24 = sphi 0, %s31
      %s25 = sphi 0, %s23
      %s26 = sphi 0, %s24
      %s27 = sphi 0, %s25
      %s28 = sphi 0, %s26
      %s38 = sphi 0, %s40
      %s41 = sphi 0, %s38
      %s42 = sphi 0, %s41
      %s58 = sphi 0, %s42
      %s62 = sphi 0, %s62
      %s64 = sphi 0, %s62
      %s65 = sphi 0, %s64
      %s79 = sphi 0, %s65
      %s83 = sphi 0, %s83
      %s85 = sphi 0, %s83
      %s86 = sphi 0, %s85
      %s100 = sphi 0, %s86
      %s104 = sphi 0, %s104
      %s106 = sphi 0, %s104
      %s107 = sphi 0, %s106
      %s121 = sphi 0, %s107
      %s125 = sphi 0, %s125
      %s127 = sphi 0, %s125
      %s128 = sphi 0, %s127
      %s142 = sphi 0, %s128
      %s146 = sphi 0, %s146
      %s148 = sphi 0, %s146
      %s149 = sphi 0, %s148
      %s163 = sphi 0, %s149
      %s171 = sphi 0, %s173
      %s174 = sphi 0, %s171
      %s175 = sphi 0, %s174
      %s191 = sphi 0, %s175
    $region4: #{tpu_custom_call.1} parent=1 // loop_header_branch
      %19 = sbr.rel (%p17) target = $region8
    $region5: #{tpu_custom_call.1} parent=1 // loop_body
      %s21 = ssub.s32 %s16, 1
      %s22 = ssub.s32 %s16, 2
      %s29 = sadd.s32 1, %s24
      %p30 = scmp.ge.s32.totalorder %s29, 1
      %s31 = scalar_select %p30, 0, %s29
      %s32 = sadd.s32 1, %s23
      %s33 = scalar_select %p30, %s32, %s23
      %p34 = scmp.ge.s32.totalorder %s33, 2
      %s35 = scalar_select %p34, 0, %s33
      %s36 = ssub.s32 %s23, %s35
      %p37 = scmp.eq.s32.totalorder %s36, 0
      %s39 = sadd.s32 %s38, 1
      %s40 = scalar_select %p37, %s38, %s39
      %p43 = pneg %p37
      %p44 = scmp.eq.s32.totalorder %s16, 1
      %p45 = por %p43, %p44
      %p46 = scmp.ne.s32.totalorder %s38, %s41
      %p47 = scmp.eq.s32.totalorder %s16, 0
      %p48 = por %p46, %p47
      %p49 = scmp.ne.s32.totalorder %s38, %s41
      %p50 = scmp.eq.s32.totalorder %s21, 1
      %p51 = por %p49, %p50
      %p52 = scmp.ne.s32.totalorder %s41, %s42
      %p53 = scmp.eq.s32.totalorder %s21, 0
      %p54 = por %p52, %p53
      %p55 = scmp.ne.s32.totalorder %s41, %s42
      %p56 = scmp.eq.s32.totalorder %s22, 1
      %p57 = por %p55, %p56
      %p59 = scmp.ne.s32.totalorder %s42, %s58
      %p60 = scmp.eq.s32.totalorder %s22, 0
      %p61 = por %p59, %p60
      %s63 = sadd.s32 %s62, 1
      %p66 = scmp.eq.s32.totalorder %s16, 1
      %p67 = scmp.ne.s32.totalorder %s62, %s64
      %p68 = scmp.eq.s32.totalorder %s16, 0
      %p69 = por %p67, %p68
      %p70 = scmp.ne.s32.totalorder %s62, %s64
      %p71 = scmp.eq.s32.totalorder %s21, 1
      %p72 = por %p70, %p71
      %p73 = scmp.ne.s32.totalorder %s64, %s65
      %p74 = scmp.eq.s32.totalorder %s21, 0
      %p75 = por %p73, %p74
      %p76 = scmp.ne.s32.totalorder %s64, %s65
      %p77 = scmp.eq.s32.totalorder %s22, 1
      %p78 = por %p76, %p77
      %p80 = scmp.ne.s32.totalorder %s65, %s79
      %p81 = scmp.eq.s32.totalorder %s22, 0
      %p82 = por %p80, %p81
      %s84 = sadd.s32 %s83, 1
      %p87 = scmp.eq.s32.totalorder %s16, 1
      %p88 = scmp.ne.s32.totalorder %s83, %s85
      %p89 = scmp.eq.s32.totalorder %s16, 0
      %p90 = por %p88, %p89
      %p91 = scmp.ne.s32.totalorder %s83, %s85
      %p92 = scmp.eq.s32.totalorder %s21, 1
      %p93 = por %p91, %p92
      %p94 = scmp.ne.s32.totalorder %s85, %s86
      %p95 = scmp.eq.s32.totalorder %s21, 0
      %p96 = por %p94, %p95
      %p97 = scmp.ne.s32.totalorder %s85, %s86
      %p98 = scmp.eq.s32.totalorder %s22, 1
      %p99 = por %p97, %p98
      %p101 = scmp.ne.s32.totalorder %s86, %s100
      %p102 = scmp.eq.s32.totalorder %s22, 0
      %p103 = por %p101, %p102
      %s105 = sadd.s32 %s104, 1
      %p108 = scmp.eq.s32.totalorder %s16, 1
      %p109 = scmp.ne.s32.totalorder %s104, %s106
      %p110 = scmp.eq.s32.totalorder %s16, 0
      %p111 = por %p109, %p110
      %p112 = scmp.ne.s32.totalorder %s104, %s106
      %p113 = scmp.eq.s32.totalorder %s21, 1
      %p114 = por %p112, %p113
      %p115 = scmp.ne.s32.totalorder %s106, %s107
      %p116 = scmp.eq.s32.totalorder %s21, 0
      %p117 = por %p115, %p116
      %p118 = scmp.ne.s32.totalorder %s106, %s107
      %p119 = scmp.eq.s32.totalorder %s22, 1
      %p120 = por %p118, %p119
      %p122 = scmp.ne.s32.totalorder %s107, %s121
      %p123 = scmp.eq.s32.totalorder %s22, 0
      %p124 = por %p122, %p123
      %s126 = sadd.s32 %s125, 1
      %p129 = scmp.eq.s32.totalorder %s16, 1
      %p130 = scmp.ne.s32.totalorder %s125, %s127
      %p131 = scmp.eq.s32.totalorder %s16, 0
      %p132 = por %p130, %p131
      %p133 = scmp.ne.s32.totalorder %s125, %s127
      %p134 = scmp.eq.s32.totalorder %s21, 1
      %p135 = por %p133, %p134
      %p136 = scmp.ne.s32.totalorder %s127, %s128
      %p137 = scmp.eq.s32.totalorder %s21, 0
      %p138 = por %p136, %p137
      %p139 = scmp.ne.s32.totalorder %s127, %s128
      %p140 = scmp.eq.s32.totalorder %s22, 1
      %p141 = por %p139, %p140
      %p143 = scmp.ne.s32.totalorder %s128, %s142
      %p144 = scmp.eq.s32.totalorder %s22, 0
      %p145 = por %p143, %p144
      %s147 = sadd.s32 %s146, 1
      %p150 = scmp.eq.s32.totalorder %s16, 1
      %p151 = scmp.ne.s32.totalorder %s146, %s148
      %p152 = scmp.eq.s32.totalorder %s16, 0
      %p153 = por %p151, %p152
      %p154 = scmp.ne.s32.totalorder %s146, %s148
      %p155 = scmp.eq.s32.totalorder %s21, 1
      %p156 = por %p154, %p155
      %p157 = scmp.ne.s32.totalorder %s148, %s149
      %p158 = scmp.eq.s32.totalorder %s21, 0
      %p159 = por %p157, %p158
      %p160 = scmp.ne.s32.totalorder %s148, %s149
      %p161 = scmp.eq.s32.totalorder %s22, 1
      %p162 = por %p160, %p161
      %p164 = scmp.ne.s32.totalorder %s149, %s163
      %p165 = scmp.eq.s32.totalorder %s22, 0
      %p166 = por %p164, %p165
      %s167 = ssub.s32 %s23, %s35
      %s168 = ssub.s32 %s24, %s31
      %s169 = sor.u32 %s167, %s168
      %p170 = scmp.eq.s32.totalorder %s169, 0
      %s172 = sadd.s32 %s171, 1
      %s173 = scalar_select %p170, %s171, %s172
      %p176 = pneg %p170
      %p177 = scmp.eq.s32.totalorder %s16, 1
      %p178 = por %p176, %p177
      %p179 = scmp.ne.s32.totalorder %s171, %s174
      %p180 = scmp.eq.s32.totalorder %s16, 0
      %p181 = por %p179, %p180
      %p182 = scmp.ne.s32.totalorder %s171, %s174
      %p183 = scmp.eq.s32.totalorder %s21, 1
      %p184 = por %p182, %p183
      %p185 = scmp.ne.s32.totalorder %s174, %s175
      %p186 = scmp.eq.s32.totalorder %s21, 0
      %p187 = por %p185, %p186
      %p188 = scmp.ne.s32.totalorder %s174, %s175
      %p189 = scmp.eq.s32.totalorder %s22, 1
      %p190 = por %p188, %p189
      %p192 = scmp.ne.s32.totalorder %s175, %s191
      %p193 = scmp.eq.s32.totalorder %s22, 0
      %p194 = por %p192, %p193
      %p195 = scmp.le.s32.totalorder 1, %s16
      %p196 = scmp.lt.s32.totalorder %s16, 3
      %p197 = pnand %p195, %p196
      %p198 = pneg %p197
      // Predicated region
      $region9: #{tpu_custom_call.1} parent=5 // pred_check
        _
      $region10: #{tpu_custom_call.1} parent=5 // pred_check_branch
        %200 = sbr.rel (%p197) target = $region12
      $region11: #{tpu_custom_call.1} parent=5 // pred_region
        %s201 = ssub.s32 %s16, 1
        // Predicated region
        $region13: #{tpu_custom_call.1} parent=11 // pred_check
          %p202 = pneg %p75
        $region14: #{tpu_custom_call.1} parent=11 // pred_check_branch
          %204 = sbr.rel (%p202) target = $region16
        $region15: #{tpu_custom_call.1} parent=11 // pred_region
          %s206 = ssub.s32 256, 256
          %207 = vsyncadd [#allocation5], %s206
          %s209 = sshll.u32 [#allocation4], 4
          %s210 = int_to_ptr.vmem [resolvable:$true] %s209
          %212 = dma.hbm_to_vmem [thread:$0]  %s1, 256, %s210, [#allocation5]
        $region16: #{tpu_custom_call.1} parent=11 // pred_fallthru
          _
        // Predicated region
        $region17: #{tpu_custom_call.1} parent=11 // pred_check
          %p213 = pneg %p96
        $region18: #{tpu_custom_call.1} parent=11 // pred_check_branch
          %215 = sbr.rel (%p213) target = $region20
        $region19: #{tpu_custom_call.1} parent=11 // pred_region
          _
        $region20: #{tpu_custom_call.1} parent=11 // pred_fallthru
          _
        // Predicated region
        $region21: #{tpu_custom_call.1} parent=11 // pred_check
          %p216 = pneg %p117
        $region22: #{tpu_custom_call.1} parent=11 // pred_check_branch
          %218 = sbr.rel (%p216) target = $region24
        $region23: #{tpu_custom_call.1} parent=11 // pred_region
          _
        $region24: #{tpu_custom_call.1} parent=11 // pred_fallthru
          _
        // Predicated region
        $region25: #{tpu_custom_call.1} parent=11 // pred_check
          %p219 = pneg %p138
        $region26: #{tpu_custom_call.1} parent=11 // pred_check_branch
          %221 = sbr.rel (%p219) target = $region28
        $region27: #{tpu_custom_call.1} parent=11 // pred_region
          _
        $region28: #{tpu_custom_call.1} parent=11 // pred_fallthru
          _
        // Predicated region
        $region29: #{tpu_custom_call.1} parent=11 // pred_check
          %p222 = pneg %p159
        $region30: #{tpu_custom_call.1} parent=11 // pred_check_branch
          %224 = sbr.rel (%p222) target = $region32
        $region31: #{tpu_custom_call.1} parent=11 // pred_region
          _
        $region32: #{tpu_custom_call.1} parent=11 // pred_fallthru
          _
      $region12: #{tpu_custom_call.1} parent=5 // pred_fallthru
        _
      %p225 = scmp.lt.s32.totalorder %s16, 2
      // Predicated region
      $region33: #{tpu_custom_call.1} parent=5 // pred_check
        %p226 = pneg %p225
      $region34: #{tpu_custom_call.1} parent=5 // pred_check_branch
        %228 = sbr.rel (%p226) target = $region36
      $region35: #{tpu_custom_call.1} parent=5 // pred_region
        // Predicated region
        $region37: #{tpu_custom_call.1} parent=35 // pred_check
          %p229 = pneg %p48
        $region38: #{tpu_custom_call.1} parent=35 // pred_check_branch
          %231 = sbr.rel (%p229) target = $region40
        $region39: #{tpu_custom_call.1} parent=35 // pred_region
          %p232 = scmp.lt.s32.totalorder %s23, 1
          %s233 = scalar_select %p232, %s23, 1
          %s234 = smul.addr %s233, 2
          %s235 = smul.addr %s234, 8
          %s236 = scalar_lea.vmem %s0, %s235
        $region40: #{tpu_custom_call.1} parent=35 // pred_fallthru
          _
      $region36: #{tpu_custom_call.1} parent=5 // pred_fallthru
        _
      %p237 = scmp.le.s32.totalorder 1, %s16
      %p238 = scmp.lt.s32.totalorder %s16, 3
      %p239 = pnand %p237, %p238
      %p240 = pneg %p239
      // Predicated region
      $region41: #{tpu_custom_call.1} parent=5 // pred_check
        _
      $region42: #{tpu_custom_call.1} parent=5 // pred_check_branch
        %242 = sbr.rel (%p239) target = $region44
      $region43: #{tpu_custom_call.1} parent=5 // pred_region
        %s243 = ssub.s32 %s16, 1
        // Predicated region
        $region45: #{tpu_custom_call.1} parent=43 // pred_check
          %p244 = pneg %p75
        $region46: #{tpu_custom_call.1} parent=43 // pred_check_branch
          %246 = sbr.rel (%p244) target = $region48
        $region47: #{tpu_custom_call.1} parent=43 // pred_region
          %247 = dma.done [#allocation5], 256
        $region48: #{tpu_custom_call.1} parent=43 // pred_fallthru
          _
        %p248 = scmp.lt.s32.totalorder %s25, 1
        %s249 = scalar_select %p248, %s25, 1
        %s250 = smul.addr %s249, 2
        %s251 = smul.addr %s250, 8
        %s252 = scalar_lea.vmem %s0, %s251
        %p253 = pneg %p54
        %p254 = pneg %p51
        %p255 = pneg %p75
        %p256 = pneg %p72
        %p257 = pneg %p96
        %p258 = pneg %p93
        %p259 = pneg %p117
        %p260 = pneg %p114
        %p261 = pneg %p138
        %p262 = pneg %p135
        %p263 = pneg %p159
        %p264 = pneg %p156
        %p265 = pneg %p187
        %p266 = pneg %p184
        %s267 = sand.u32 %s174, 1
        %s268 = scalar_lea.sflag [#allocation6], %s267
        %s269 = sand.u32 %s174, 1
        %s270 = smul.addr %s269, 16
        %s271 = scalar_lea.vmem [#allocation7], %s270
        %p272 = scmp.lt.s32.totalorder %s25, 1
        %s273 = scalar_select %p272, %s25, 1
        %s274 = smul.addr %s273, 2
        %s275 = smul.addr %s274, 8
        %s276 = scalar_lea.vmem %s0, %s275
        %s277 = smul.u32 2, %s26
        %p279 = scmp.eq.s32.totalorder %s26, 0
        // Predicated region
        $region49: #{tpu_custom_call.1} parent=43 // pred_check
          %p280 = pneg %p279
        $region50: #{tpu_custom_call.1} parent=43 // pred_check_branch
          %282 = sbr.rel (%p280) target = $region52
        $region51: #{tpu_custom_call.1} parent=43 // pred_region
          %v283 = vld [vmem:[%s276] sm:$0xff]
          %v284 = vld [vmem:[%s276 + $0x8] sm:$0xff]
          %v285 = vld [vmem:[#allocation4] sm:$0xff]
          %v286 = vld [vmem:[#allocation4 + $0x8] sm:$0xff]
          %v287 = vadd.f32 %v283, %v285
          %v288 = vadd.f32 %v284, %v286
          %v289 = vpack.c.bf16 %v287, %v287
          %v290 = vpack.c.bf16 %v288, %v288
          %v291 = vld [vmem:[%s3] sm:$0xf]
          %v292 = vld [vmem:[%s3 + $0x4] sm:$0xf]
          %v293 = vld [vmem:[%s3 + $0x8] sm:$0xf]
          %v294 = vld [vmem:[%s3 + $0xc] sm:$0xf]
          %v299 = vunpack.c.l.b16 %v291
          %v300 = vunpack.c.l.b16 %v292
          %v301 = vunpack.c.l.b16 %v293
          %v302 = vunpack.c.l.b16 %v294
          %v303 = vpack.c.b16 %v300, %v299
          %v304 = vpack.c.b16 %v302, %v301
          %vm305 = vcmask 64512
          %v307 = vsel %vm305, %v303, 0
          %v310 = vsel %vm305, %v304, 0
          %vm312 = vcmask 1043456
          %v314 = vsel %vm312, %v289, 0
          %v317 = vsel %vm312, %v290, 0
          %319 = vmatprep.subr.bf16.mxu0 0
          %320 = vmatpush1.bf16.msra.mxu0 0
          %321 = vmatprep.subr.bf16.mxu0 0
          %322 = vmatpush1.bf16.msra.mxu0 0
          %323 = vmatprep.subr.bf16.mxu0 0
          %324 = vmatpush1.bf16.msra.mxu0 0
          %325 = vmatprep.subr.bf16.mxu0 0
          %326 = vmatpush1.bf16.msra.mxu0 0
          %327 = vmatprep.subr.bf16.mxu0 0
          %328 = vmatpush1.bf16.msra.mxu0 0
          %329 = vmatprep.subr.bf16.mxu0 0
          %330 = vmatpush1.bf16.msra.mxu0 0
          %331 = vmatprep.subr.bf16.mxu0 0
          %332 = vmatpush1.bf16.msra.mxu0 0
          %333 = vmatprep.subr.bf16.mxu0 %v317
          %334 = vmatpush1.bf16.msra.mxu0 %v314
          %335 = vmatprep.subr.bf16.mxu0 0
          %336 = vmatpush2.bf16.msra.mxu0 0
          %337 = vmatprep.subr.bf16.mxu0 0
          %338 = vmatpush2.bf16.msra.mxu0 0
          %339 = vmatprep.subr.bf16.mxu0 0
          %340 = vmatpush2.bf16.msra.mxu0 0
          %341 = vmatprep.subr.bf16.mxu0 0
          %342 = vmatpush2.bf16.msra.mxu0 0
          %343 = vmatprep.subr.bf16.mxu0 0
          %344 = vmatpush2.bf16.msra.mxu0 0
          %345 = vmatprep.subr.bf16.mxu0 0
          %346 = vmatpush2.bf16.msra.mxu0 0
          %347 = vmatprep.subr.bf16.mxu0 0
          %348 = vmatpush2.bf16.msra.mxu0 0
          %349 = vmatprep.subr.bf16.mxu0 0
          %350 = vmatpush2.bf16.msra.mxu0 0
          %351 = vmatprep.mubr.bf16.mxu0 0
          %352 = vmatmul.mubr.bf16.gmra.mxu0 %v307
          %v353 = vpop.f32.mrf.mxu0
          %v354 = vadd.f32 0.0, %v353
          %v355 = vpop.f32.mrf.mxu0
          %v356 = vadd.f32 0.0, %v355
          %v357 = vpop.f32.mrf.mxu0
          %v358 = vadd.f32 0.0, %v357
          %v359 = vpop.f32.mrf.mxu0
          %v360 = vadd.f32 0.0, %v359
          %361 = vmatprep.mubr.bf16.mxu0 0
          %362 = vmatmul.mubr.bf16.gmra.mxu0 %v310
          %v363 = vpop.f32.mrf.mxu0
          %v364 = vadd.f32 0.0, %v363
          %v365 = vpop.f32.mrf.mxu0
          %v366 = vadd.f32 0.0, %v365
          %v367 = vpop.f32.mrf.mxu0
          %v368 = vadd.f32 0.0, %v367
          %v369 = vpop.f32.mrf.mxu0
          %v370 = vadd.f32 0.0, %v369
          %371 = vdwg.mxu0
          %v372 = vpack.c.bf16 %v358, %v354
          %v373 = vpack.c.bf16 %v360, %v356
          %v374 = vpack.c.bf16 %v368, %v364
          %v375 = vpack.c.bf16 %v370, %v366
          %v380 = vunpack.c.l.b16 %v372
          %v381 = vunpack.c.l.b16 %v373
          %v382 = vunpack.c.h.b16 %v372
          %v383 = vunpack.c.h.b16 %v373
          %v384 = vunpack.c.l.b16 %v374
          %v385 = vunpack.c.l.b16 %v375
          %v386 = vunpack.c.h.b16 %v374
          %v387 = vunpack.c.h.b16 %v375
          %v388 = vpack.c.b16 %v381, %v380
          %v389 = vpack.c.b16 %v383, %v382
          %v390 = vpack.c.b16 %v385, %v384
          %v391 = vpack.c.b16 %v387, %v386
          %396 = vst [vmem:[#allocation2] sm:$0xff] %v388
          %397 = vst [vmem:[#allocation2 + $0x8] sm:$0xff] %v389
          %398 = vst [vmem:[#allocation2 + $0x10] sm:$0xff] %v390
          %399 = vst [vmem:[#allocation2 + $0x18] sm:$0xff] %v391
        $region52: #{tpu_custom_call.1} parent=43 // pred_fallthru
          _
        %s400 = smul.u32 %s26, 256
        %s401 = sshra.s32 %s400, 7
        %s402 = sand.u32 %s400, 127
        %s403 = smul.addr %s401, 8
        %s404 = scalar_lea.vmem %s276, %s403
        %v405 = vld [vmem:[%s404] sm:$0xff]
        %v406 = vld [vmem:[%s404 + $0x8] sm:$0xff]
        %s407 = smul.addr %s401, 8
        %s408 = scalar_lea.vmem [#allocation4], %s407
        %v409 = vld [vmem:[%s408] sm:$0xff]
        %v410 = vld [vmem:[%s408 + $0x8] sm:$0xff]
        %v411 = vadd.f32 %v405, %v409
        %v412 = vadd.f32 %v406, %v410
        %v413 = vld [vmem:[%s2] sm:$0xf]
        %v414 = vld [vmem:[%s2 + $0x4] sm:$0xf]
        %v415 = vpack.c.bf16 %v411, %v411
        %v416 = vpack.c.bf16 %v412, %v412
        %v419 = vunpack.c.l.b16 %v413
        %v420 = vunpack.c.l.b16 %v414
        %v421 = vpack.c.b16 %v420, %v419
        %vm422 = vcmask 64512
        %v424 = vsel %vm422, %v421, 0
        %vm426 = vcmask 1043456
        %v428 = vsel %vm426, %v415, 0
        %v431 = vsel %vm426, %v416, 0
        %433 = vmatprep.subr.bf16.mxu0 0
        %434 = vmatpush1.bf16.msra.mxu0 0
        %435 = vmatprep.subr.bf16.mxu0 0
        %436 = vmatpush1.bf16.msra.mxu0 0
        %437 = vmatprep.subr.bf16.mxu0 0
        %438 = vmatpush1.bf16.msra.mxu0 0
        %439 = vmatprep.subr.bf16.mxu0 0
        %440 = vmatpush1.bf16.msra.mxu0 0
        %441 = vmatprep.subr.bf16.mxu0 0
        %442 = vmatpush1.bf16.msra.mxu0 0
        %443 = vmatprep.subr.bf16.mxu0 0
        %444 = vmatpush1.bf16.msra.mxu0 0
        %445 = vmatprep.subr.bf16.mxu0 0
        %446 = vmatpush1.bf16.msra.mxu0 0
        %447 = vmatprep.subr.bf16.mxu0 %v431
        %448 = vmatpush1.bf16.msra.mxu0 %v428
        %449 = vmatprep.subr.bf16.mxu0 0
        %450 = vmatpush2.bf16.msra.mxu0 0
        %451 = vmatprep.subr.bf16.mxu0 0
        %452 = vmatpush2.bf16.msra.mxu0 0
        %453 = vmatprep.subr.bf16.mxu0 0
        %454 = vmatpush2.bf16.msra.mxu0 0
        %455 = vmatprep.subr.bf16.mxu0 0
        %456 = vmatpush2.bf16.msra.mxu0 0
        %457 = vmatprep.subr.bf16.mxu0 0
        %458 = vmatpush2.bf16.msra.mxu0 0
        %459 = vmatprep.subr.bf16.mxu0 0
        %460 = vmatpush2.bf16.msra.mxu0 0
        %461 = vmatprep.subr.bf16.mxu0 0
        %462 = vmatpush2.bf16.msra.mxu0 0
        %463 = vmatprep.subr.bf16.mxu0 0
        %464 = vmatpush2.bf16.msra.mxu0 0
        %465 = vmatprep.mubr.bf16.mxu0 0
        %466 = vmatmul.mubr.bf16.gmra.mxu0 %v424
        %v467 = vpop.f32.mrf.mxu0
        %v468 = vadd.f32 0.0, %v467
        %v469 = vpop.f32.mrf.mxu0
        %v470 = vadd.f32 0.0, %v469
        %v471 = vpop.f32.mrf.mxu0
        %v472 = vadd.f32 0.0, %v471
        %v473 = vpop.f32.mrf.mxu0
        %v474 = vadd.f32 0.0, %v473
        %475 = vdwg.mxu0
        %v476 = vpack.c.bf16 %v468, %v468
        %v477 = vpack.c.bf16 %v470, %v470
        %v478 = vld [vmem:[#allocation2] sm:$0xff]
        %v479 = vld [vmem:[#allocation2 + $0x10] sm:$0xff]
        %v481 = vunpack.c.l.b16 %v478
        %v482 = vunpack.c.h.b16 %v478
        %v483 = vpack.c.b16 %v481, %v481
        %v484 = vpack.c.b16 %v482, %v482
        %487 = vxpose.xlu0.c.b16.start [1/8] %v483, 128
        %488 = vxpose.xlu0.c.b16.cont [2/8] 0, 128
        %489 = vxpose.xlu0.c.b16.cont [3/8] 0, 128
        %490 = vxpose.xlu0.c.b16.cont [4/8] 0, 128
        %491 = vxpose.xlu0.c.b16.cont [5/8] 0, 128
        %492 = vxpose.xlu0.c.b16.cont [6/8] 0, 128
        %493 = vxpose.xlu0.c.b16.cont [7/8] 0, 128
        %494 = vxpose.xlu0.c.b16.end [8/8] 0, 128
        %v495 = vpop.trf.xlu0
        %v496 = vpop.trf.xlu0
        %v497 = vpop.trf.xlu0
        %v498 = vpop.trf.xlu0
        %v499 = vpop.trf.xlu0
        %v500 = vpop.trf.xlu0
        %v501 = vpop.trf.xlu0
        %v502 = vpop.trf.xlu0
        %503 = vxpose.xlu0.c.b16.start [1/8] %v484, 128
        %504 = vxpose.xlu0.c.b16.cont [2/8] 0, 128
        %505 = vxpose.xlu0.c.b16.cont [3/8] 0, 128
        %506 = vxpose.xlu0.c.b16.cont [4/8] 0, 128
        %507 = vxpose.xlu0.c.b16.cont [5/8] 0, 128
        %508 = vxpose.xlu0.c.b16.cont [6/8] 0, 128
        %509 = vxpose.xlu0.c.b16.cont [7/8] 0, 128
        %510 = vxpose.xlu0.c.b16.end [8/8] 0, 128
        %v511 = vpop.trf.xlu0
        %v512 = vpop.trf.xlu0
        %v513 = vpop.trf.xlu0
        %v514 = vpop.trf.xlu0
        %v515 = vpop.trf.xlu0
        %v516 = vpop.trf.xlu0
        %v517 = vpop.trf.xlu0
        %v518 = vpop.trf.xlu0
        %v520 = vsel %vm422, %v495, 0
        %v523 = vsel %vm422, %v496, 0
        %v526 = vsel %vm422, %v497, 0
        %v529 = vsel %vm422, %v498, 0
        %v532 = vsel %vm422, %v499, 0
        %v535 = vsel %vm422, %v500, 0
        %v538 = vsel %vm422, %v501, 0
        %v541 = vsel %vm422, %v502, 0
        %v544 = vsel %vm422, %v511, 0
        %v547 = vsel %vm422, %v512, 0
        %v550 = vsel %vm422, %v513, 0
        %v553 = vsel %vm422, %v514, 0
        %v556 = vsel %vm422, %v515, 0
        %v559 = vsel %vm422, %v516, 0
        %v562 = vsel %vm422, %v517, 0
        %v565 = vsel %vm422, %v518, 0
        %v568 = vsel %vm426, %v476, 0
        %v571 = vsel %vm426, %v477, 0
        %573 = vmatprep.subr.bf16.mxu0 0
        %574 = vmatpush1.bf16.msra.mxu0 0
        %575 = vmatprep.subr.bf16.mxu0 0
        %576 = vmatpush1.bf16.msra.mxu0 0
        %577 = vmatprep.subr.bf16.mxu0 0
        %578 = vmatpush1.bf16.msra.mxu0 0
        %579 = vmatprep.subr.bf16.mxu0 0
        %580 = vmatpush1.bf16.msra.mxu0 0
        %581 = vmatprep.subr.bf16.mxu0 0
        %582 = vmatpush1.bf16.msra.mxu0 0
        %583 = vmatprep.subr.bf16.mxu0 0
        %584 = vmatpush1.bf16.msra.mxu0 0
        %585 = vmatprep.subr.bf16.mxu0 0
        %586 = vmatpush1.bf16.msra.mxu0 0
        %587 = vmatprep.subr.bf16.mxu0 %v571
        %588 = vmatpush1.bf16.msra.mxu0 %v568
        %589 = vmatprep.subr.bf16.mxu0 0
        %590 = vmatpush2.bf16.msra.mxu0 0
        %591 = vmatprep.subr.bf16.mxu0 0
        %592 = vmatpush2.bf16.msra.mxu0 0
        %593 = vmatprep.subr.bf16.mxu0 0
        %594 = vmatpush2.bf16.msra.mxu0 0
        %595 = vmatprep.subr.bf16.mxu0 0
        %596 = vmatpush2.bf16.msra.mxu0 0
        %597 = vmatprep.subr.bf16.mxu0 0
        %598 = vmatpush2.bf16.msra.mxu0 0
        %599 = vmatprep.subr.bf16.mxu0 0
        %600 = vmatpush2.bf16.msra.mxu0 0
        %601 = vmatprep.subr.bf16.mxu0 0
        %602 = vmatpush2.bf16.msra.mxu0 0
        %603 = vmatprep.subr.bf16.mxu0 0
        %604 = vmatpush2.bf16.msra.mxu0 0
        %605 = vmatprep.mubr.bf16.mxu0 0
        %606 = vmatmul.mubr.bf16.gmra.mxu0 %v520
        %v607 = vpop.f32.mrf.mxu0
        %v608 = vadd.f32 0.0, %v607
        %v609 = vpop.f32.mrf.mxu0
        %v610 = vadd.f32 0.0, %v609
        %v611 = vpop.f32.mrf.mxu0
        %v612 = vadd.f32 0.0, %v611
        %v613 = vpop.f32.mrf.mxu0
        %v614 = vadd.f32 0.0, %v613
        %615 = vmatprep.mubr.bf16.mxu0 0
        %616 = vmatmul.mubr.bf16.gmra.mxu0 %v523
        %v617 = vpop.f32.mrf.mxu0
        %v618 = vadd.f32 0.0, %v617
        %v619 = vpop.f32.mrf.mxu0
        %v620 = vadd.f32 0.0, %v619
        %v621 = vpop.f32.mrf.mxu0
        %v622 = vadd.f32 0.0, %v621
        %v623 = vpop.f32.mrf.mxu0
        %v624 = vadd.f32 0.0, %v623
        %625 = vmatprep.mubr.bf16.mxu0 0
        %626 = vmatmul.mubr.bf16.gmra.mxu0 %v526
        %v627 = vpop.f32.mrf.mxu0
        %v628 = vadd.f32 0.0, %v627
        %v629 = vpop.f32.mrf.mxu0
        %v630 = vadd.f32 0.0, %v629
        %v631 = vpop.f32.mrf.mxu0
        %v632 = vadd.f32 0.0, %v631
        %v633 = vpop.f32.mrf.mxu0
        %v634 = vadd.f32 0.0, %v633
        %635 = vmatprep.mubr.bf16.mxu0 0
        %636 = vmatmul.mubr.bf16.gmra.mxu0 %v529
        %v637 = vpop.f32.mrf.mxu0
        %v638 = vadd.f32 0.0, %v637
        %v639 = vpop.f32.mrf.mxu0
        %v640 = vadd.f32 0.0, %v639
        %v641 = vpop.f32.mrf.mxu0
        %v642 = vadd.f32 0.0, %v641
        %v643 = vpop.f32.mrf.mxu0
        %v644 = vadd.f32 0.0, %v643
        %645 = vmatprep.mubr.bf16.mxu0 0
        %646 = vmatmul.mubr.bf16.gmra.mxu0 %v532
        %v647 = vpop.f32.mrf.mxu0
        %v648 = vadd.f32 0.0, %v647
        %v649 = vpop.f32.mrf.mxu0
        %v650 = vadd.f32 0.0, %v649
        %v651 = vpop.f32.mrf.mxu0
        %v652 = vadd.f32 0.0, %v651
        %v653 = vpop.f32.mrf.mxu0
        %v654 = vadd.f32 0.0, %v653
        %655 = vmatprep.mubr.bf16.mxu0 0
        %656 = vmatmul.mubr.bf16.gmra.mxu0 %v535
        %v657 = vpop.f32.mrf.mxu0
        %v658 = vadd.f32 0.0, %v657
        %v659 = vpop.f32.mrf.mxu0
        %v660 = vadd.f32 0.0, %v659
        %v661 = vpop.f32.mrf.mxu0
        %v662 = vadd.f32 0.0, %v661
        %v663 = vpop.f32.mrf.mxu0
        %v664 = vadd.f32 0.0, %v663
        %665 = vmatprep.mubr.bf16.mxu0 0
        %666 = vmatmul.mubr.bf16.gmra.mxu0 %v538
        %v667 = vpop.f32.mrf.mxu0
        %v668 = vadd.f32 0.0, %v667
        %v669 = vpop.f32.mrf.mxu0
        %v670 = vadd.f32 0.0, %v669
        %v671 = vpop.f32.mrf.mxu0
        %v672 = vadd.f32 0.0, %v671
        %v673 = vpop.f32.mrf.mxu0
        %v674 = vadd.f32 0.0, %v673
        %675 = vmatprep.mubr.bf16.mxu0 0
        %676 = vmatmul.mubr.bf16.gmra.mxu0 %v541
        %v677 = vpop.f32.mrf.mxu0
        %v678 = vadd.f32 0.0, %v677
        %v679 = vpop.f32.mrf.mxu0
        %v680 = vadd.f32 0.0, %v679
        %v681 = vpop.f32.mrf.mxu0
        %v682 = vadd.f32 0.0, %v681
        %v683 = vpop.f32.mrf.mxu0
        %v684 = vadd.f32 0.0, %v683
        %685 = vmatprep.mubr.bf16.mxu0 0
        %686 = vmatmul.mubr.bf16.gmra.mxu0 %v544
        %v687 = vpop.f32.mrf.mxu0
        %v688 = vadd.f32 0.0, %v687
        %v689 = vpop.f32.mrf.mxu0
        %v690 = vadd.f32 0.0, %v689
        %v691 = vpop.f32.mrf.mxu0
        %v692 = vadd.f32 0.0, %v691
        %v693 = vpop.f32.mrf.mxu0
        %v694 = vadd.f32 0.0, %v693
        %695 = vmatprep.mubr.bf16.mxu0 0
        %696 = vmatmul.mubr.bf16.gmra.mxu0 %v547
        %v697 = vpop.f32.mrf.mxu0
        %v698 = vadd.f32 0.0, %v697
        %v699 = vpop.f32.mrf.mxu0
        %v700 = vadd.f32 0.0, %v699
        %v701 = vpop.f32.mrf.mxu0
        %v702 = vadd.f32 0.0, %v701
        %v703 = vpop.f32.mrf.mxu0
        %v704 = vadd.f32 0.0, %v703
        %705 = vmatprep.mubr.bf16.mxu0 0
        %706 = vmatmul.mubr.bf16.gmra.mxu0 %v550
        %v707 = vpop.f32.mrf.mxu0
        %v708 = vadd.f32 0.0, %v707
        %v709 = vpop.f32.mrf.mxu0
        %v710 = vadd.f32 0.0, %v709
        %v711 = vpop.f32.mrf.mxu0
        %v712 = vadd.f32 0.0, %v711
        %v713 = vpop.f32.mrf.mxu0
        %v714 = vadd.f32 0.0, %v713
        %715 = vmatprep.mubr.bf16.mxu0 0
        %716 = vmatmul.mubr.bf16.gmra.mxu0 %v553
        %v717 = vpop.f32.mrf.mxu0
        %v718 = vadd.f32 0.0, %v717
        %v719 = vpop.f32.mrf.mxu0
        %v720 = vadd.f32 0.0, %v719
        %v721 = vpop.f32.mrf.mxu0
        %v722 = vadd.f32 0.0, %v721
        %v723 = vpop.f32.mrf.mxu0
        %v724 = vadd.f32 0.0, %v723
        %725 = vmatprep.mubr.bf16.mxu0 0
        %726 = vmatmul.mubr.bf16.gmra.mxu0 %v556
        %v727 = vpop.f32.mrf.mxu0
        %v728 = vadd.f32 0.0, %v727
        %v729 = vpop.f32.mrf.mxu0
        %v730 = vadd.f32 0.0, %v729
        %v731 = vpop.f32.mrf.mxu0
        %v732 = vadd.f32 0.0, %v731
        %v733 = vpop.f32.mrf.mxu0
        %v734 = vadd.f32 0.0, %v733
        %735 = vmatprep.mubr.bf16.mxu0 0
        %736 = vmatmul.mubr.bf16.gmra.mxu0 %v559
        %v737 = vpop.f32.mrf.mxu0
        %v738 = vadd.f32 0.0, %v737
        %v739 = vpop.f32.mrf.mxu0
        %v740 = vadd.f32 0.0, %v739
        %v741 = vpop.f32.mrf.mxu0
        %v742 = vadd.f32 0.0, %v741
        %v743 = vpop.f32.mrf.mxu0
        %v744 = vadd.f32 0.0, %v743
        %745 = vmatprep.mubr.bf16.mxu0 0
        %746 = vmatmul.mubr.bf16.gmra.mxu0 %v562
        %v747 = vpop.f32.mrf.mxu0
        %v748 = vadd.f32 0.0, %v747
        %v749 = vpop.f32.mrf.mxu0
        %v750 = vadd.f32 0.0, %v749
        %v751 = vpop.f32.mrf.mxu0
        %v752 = vadd.f32 0.0, %v751
        %v753 = vpop.f32.mrf.mxu0
        %v754 = vadd.f32 0.0, %v753
        %755 = vmatprep.mubr.bf16.mxu0 0
        %756 = vmatmul.mubr.bf16.gmra.mxu0 %v565
        %v757 = vpop.f32.mrf.mxu0
        %v758 = vadd.f32 0.0, %v757
        %v759 = vpop.f32.mrf.mxu0
        %v760 = vadd.f32 0.0, %v759
        %v761 = vpop.f32.mrf.mxu0
        %v762 = vadd.f32 0.0, %v761
        %v763 = vpop.f32.mrf.mxu0
        %v764 = vadd.f32 0.0, %v763
        %765 = vdwg.mxu0
        %v766 = vmax.f32 %v608, %v618
        %v767 = vmax.f32 %v612, %v622
        %v768 = vmax.f32 %v766, %v628
        %v769 = vmax.f32 %v767, %v632
        %v770 = vmax.f32 %v768, %v638
        %v771 = vmax.f32 %v769, %v642
        %v772 = vmax.f32 %v770, %v648
        %v773 = vmax.f32 %v771, %v652
        %v774 = vmax.f32 %v772, %v658
        %v775 = vmax.f32 %v773, %v662
        %v776 = vmax.f32 %v774, %v668
        %v777 = vmax.f32 %v775, %v672
        %v778 = vmax.f32 %v776, %v678
        %v779 = vmax.f32 %v777, %v682
        %v780 = vmax.f32 %v778, %v688
        %v781 = vmax.f32 %v779, %v692
        %v782 = vmax.f32 %v780, %v698
        %v783 = vmax.f32 %v781, %v702
        %v784 = vmax.f32 %v782, %v708
        %v785 = vmax.f32 %v783, %v712
        %v786 = vmax.f32 %v784, %v718
        %v787 = vmax.f32 %v785, %v722
        %v788 = vmax.f32 %v786, %v728
        %v789 = vmax.f32 %v787, %v732
        %v790 = vmax.f32 %v788, %v738
        %v791 = vmax.f32 %v789, %v742
        %v792 = vmax.f32 %v790, %v748
        %v793 = vmax.f32 %v791, %v752
        %v794 = vmax.f32 %v792, %v758
        %v795 = vmax.f32 %v793, %v762
        %v796 = vmax.f32 %v794, %v795
        %v797 = vrot.slane %v796, 4
        %v798 = vmax.f32 %v796, %v797
        %v799 = vrot.slane %v798, 2
        %v800 = vmax.f32 %v798, %v799
        %v801 = vrot.slane %v800, 1
        %v802 = vmax.f32 %v800, %v801
        %v803 = vmax.f32 %v610, %v620
        %v804 = vmax.f32 %v614, %v624
        %v805 = vmax.f32 %v803, %v630
        %v806 = vmax.f32 %v804, %v634
        %v807 = vmax.f32 %v805, %v640
        %v808 = vmax.f32 %v806, %v644
        %v809 = vmax.f32 %v807, %v650
        %v810 = vmax.f32 %v808, %v654
        %v811 = vmax.f32 %v809, %v660
        %v812 = vmax.f32 %v810, %v664
        %v813 = vmax.f32 %v811, %v670
        %v814 = vmax.f32 %v812, %v674
        %v815 = vmax.f32 %v813, %v680
        %v816 = vmax.f32 %v814, %v684
        %v817 = vmax.f32 %v815, %v690
        %v818 = vmax.f32 %v816, %v694
        %v819 = vmax.f32 %v817, %v700
        %v820 = vmax.f32 %v818, %v704
        %v821 = vmax.f32 %v819, %v710
        %v822 = vmax.f32 %v820, %v714
        %v823 = vmax.f32 %v821, %v720
        %v824 = vmax.f32 %v822, %v724
        %v825 = vmax.f32 %v823, %v730
        %v826 = vmax.f32 %v824, %v734
        %v827 = vmax.f32 %v825, %v740
        %v828 = vmax.f32 %v826, %v744
        %v829 = vmax.f32 %v827, %v750
        %v830 = vmax.f32 %v828, %v754
        %v831 = vmax.f32 %v829, %v760
        %v832 = vmax.f32 %v830, %v764
        %v833 = vmax.f32 %v831, %v832
        %v834 = vrot.slane %v833, 4
        %v835 = vmax.f32 %v833, %v834
        %v836 = vrot.slane %v835, 2
        %v837 = vmax.f32 %v835, %v836
        %v838 = vrot.slane %v837, 1
        %v839 = vmax.f32 %v837, %v838
        %v840 = vsub.f32 %v608, %v802
        %v841 = vsub.f32 %v610, %v839
        %v842 = vsub.f32 %v612, %v802
        %v843 = vsub.f32 %v614, %v839
        %v844 = vsub.f32 %v618, %v802
        %v845 = vsub.f32 %v620, %v839
        %v846 = vsub.f32 %v622, %v802
        %v847 = vsub.f32 %v624, %v839
        %v848 = vsub.f32 %v628, %v802
        %v849 = vsub.f32 %v630, %v839
        %v850 = vsub.f32 %v632, %v802
        %v851 = vsub.f32 %v634, %v839
        %v852 = vsub.f32 %v638, %v802
        %v853 = vsub.f32 %v640, %v839
        %v854 = vsub.f32 %v642, %v802
        %v855 = vsub.f32 %v644, %v839
        %v856 = vsub.f32 %v648, %v802
        %v857 = vsub.f32 %v650, %v839
        %v858 = vsub.f32 %v652, %v802
        %v859 = vsub.f32 %v654, %v839
        %v860 = vsub.f32 %v658, %v802
        %v861 = vsub.f32 %v660, %v839
        %v862 = vsub.f32 %v662, %v802
        %v863 = vsub.f32 %v664, %v839
        %v864 = vsub.f32 %v668, %v802
        %v865 = vsub.f32 %v670, %v839
        %v866 = vsub.f32 %v672, %v802
        %v867 = vsub.f32 %v674, %v839
        %v868 = vsub.f32 %v678, %v802
        %v869 = vsub.f32 %v680, %v839
        %v870 = vsub.f32 %v682, %v802
        %v871 = vsub.f32 %v684, %v839
        %v872 = vsub.f32 %v688, %v802
        %v873 = vsub.f32 %v690, %v839
        %v874 = vsub.f32 %v692, %v802
        %v875 = vsub.f32 %v694, %v839
        %v876 = vsub.f32 %v698, %v802
        %v877 = vsub.f32 %v700, %v839
        %v878 = vsub.f32 %v702, %v802
        %v879 = vsub.f32 %v704, %v839
        %v880 = vsub.f32 %v708, %v802
        %v881 = vsub.f32 %v710, %v839
        %v882 = vsub.f32 %v712, %v802
        %v883 = vsub.f32 %v714, %v839
        %v884 = vsub.f32 %v718, %v802
        %v885 = vsub.f32 %v720, %v839
        %v886 = vsub.f32 %v722, %v802
        %v887 = vsub.f32 %v724, %v839
        %v888 = vsub.f32 %v728, %v802
        %v889 = vsub.f32 %v730, %v839
        %v890 = vsub.f32 %v732, %v802
        %v891 = vsub.f32 %v734, %v839
        %v892 = vsub.f32 %v738, %v802
        %v893 = vsub.f32 %v740, %v839
        %v894 = vsub.f32 %v742, %v802
        %v895 = vsub.f32 %v744, %v839
        %v896 = vsub.f32 %v748, %v802
        %v897 = vsub.f32 %v750, %v839
        %v898 = vsub.f32 %v752, %v802
        %v899 = vsub.f32 %v754, %v839
        %v900 = vsub.f32 %v758, %v802
        %v901 = vsub.f32 %v760, %v839
        %v902 = vsub.f32 %v762, %v802
        %v903 = vsub.f32 %v764, %v839
        %v904 = vmul.f32 %v840, 1.442695
        %v905 = vpow.pop %v904
        %v906 = vmul.f32 %v841, 1.442695
        %v907 = vpow.pop %v906
        %v908 = vmul.f32 %v842, 1.442695
        %v909 = vpow.pop %v908
        %v910 = vmul.f32 %v843, 1.442695
        %v911 = vpow.pop %v910
        %v912 = vmul.f32 %v844, 1.442695
        %v913 = vpow.pop %v912
        %v914 = vmul.f32 %v845, 1.442695
        %v915 = vpow.pop %v914
        %v916 = vmul.f32 %v846, 1.442695
        %v917 = vpow.pop %v916
        %v918 = vmul.f32 %v847, 1.442695
        %v919 = vpow.pop %v918
        %v920 = vmul.f32 %v848, 1.442695
        %v921 = vpow.pop %v920
        %v922 = vmul.f32 %v849, 1.442695
        %v923 = vpow.pop %v922
        %v924 = vmul.f32 %v850, 1.442695
        %v925 = vpow.pop %v924
        %v926 = vmul.f32 %v851, 1.442695
        %v927 = vpow.pop %v926
        %v928 = vmul.f32 %v852, 1.442695
        %v929 = vpow.pop %v928
        %v930 = vmul.f32 %v853, 1.442695
        %v931 = vpow.pop %v930
        %v932 = vmul.f32 %v854, 1.442695
        %v933 = vpow.pop %v932
        %v934 = vmul.f32 %v855, 1.442695
        %v935 = vpow.pop %v934
        %v936 = vmul.f32 %v856, 1.442695
        %v937 = vpow.pop %v936
        %v938 = vmul.f32 %v857, 1.442695
        %v939 = vpow.pop %v938
        %v940 = vmul.f32 %v858, 1.442695
        %v941 = vpow.pop %v940
        %v942 = vmul.f32 %v859, 1.442695
        %v943 = vpow.pop %v942
        %v944 = vmul.f32 %v860, 1.442695
        %v945 = vpow.pop %v944
        %v946 = vmul.f32 %v861, 1.442695
        %v947 = vpow.pop %v946
        %v948 = vmul.f32 %v862, 1.442695
        %v949 = vpow.pop %v948
        %v950 = vmul.f32 %v863, 1.442695
        %v951 = vpow.pop %v950
        %v952 = vmul.f32 %v864, 1.442695
        %v953 = vpow.pop %v952
        %v954 = vmul.f32 %v865, 1.442695
        %v955 = vpow.pop %v954
        %v956 = vmul.f32 %v866, 1.442695
        %v957 = vpow.pop %v956
        %v958 = vmul.f32 %v867, 1.442695
        %v959 = vpow.pop %v958
        %v960 = vmul.f32 %v868, 1.442695
        %v961 = vpow.pop %v960
        %v962 = vmul.f32 %v869, 1.442695
        %v963 = vpow.pop %v962
        %v964 = vmul.f32 %v870, 1.442695
        %v965 = vpow.pop %v964
        %v966 = vmul.f32 %v871, 1.442695
        %v967 = vpow.pop %v966
        %v968 = vmul.f32 %v872, 1.442695
        %v969 = vpow.pop %v968
        %v970 = vmul.f32 %v873, 1.442695
        %v971 = vpow.pop %v970
        %v972 = vmul.f32 %v874, 1.442695
        %v973 = vpow.pop %v972
        %v974 = vmul.f32 %v875, 1.442695
        %v975 = vpow.pop %v974
        %v976 = vmul.f32 %v876, 1.442695
        %v977 = vpow.pop %v976
        %v978 = vmul.f32 %v877, 1.442695
        %v979 = vpow.pop %v978
        %v980 = vmul.f32 %v878, 1.442695
        %v981 = vpow.pop %v980
        %v982 = vmul.f32 %v879, 1.442695
        %v983 = vpow.pop %v982
        %v984 = vmul.f32 %v880, 1.442695
        %v985 = vpow.pop %v984
        %v986 = vmul.f32 %v881, 1.442695
        %v987 = vpow.pop %v986
        %v988 = vmul.f32 %v882, 1.442695
        %v989 = vpow.pop %v988
        %v990 = vmul.f32 %v883, 1.442695
        %v991 = vpow.pop %v990
        %v992 = vmul.f32 %v884, 1.442695
        %v993 = vpow.pop %v992
        %v994 = vmul.f32 %v885, 1.442695
        %v995 = vpow.pop %v994
        %v996 = vmul.f32 %v886, 1.442695
        %v997 = vpow.pop %v996
        %v998 = vmul.f32 %v887, 1.442695
        %v999 = vpow.pop %v998
        %v1000 = vmul.f32 %v888, 1.442695
        %v1001 = vpow.pop %v1000
        %v1002 = vmul.f32 %v889, 1.442695
        %v1003 = vpow.pop %v1002
        %v1004 = vmul.f32 %v890, 1.442695
        %v1005 = vpow.pop %v1004
        %v1006 = vmul.f32 %v891, 1.442695
        %v1007 = vpow.pop %v1006
        %v1008 = vmul.f32 %v892, 1.442695
        %v1009 = vpow.pop %v1008
        %v1010 = vmul.f32 %v893, 1.442695
        %v1011 = vpow.pop %v1010
        %v1012 = vmul.f32 %v894, 1.442695
        %v1013 = vpow.pop %v1012
        %v1014 = vmul.f32 %v895, 1.442695
        %v1015 = vpow.pop %v1014
        %v1016 = vmul.f32 %v896, 1.442695
        %v1017 = vpow.pop %v1016
        %v1018 = vmul.f32 %v897, 1.442695
        %v1019 = vpow.pop %v1018
        %v1020 = vmul.f32 %v898, 1.442695
        %v1021 = vpow.pop %v1020
        %v1022 = vmul.f32 %v899, 1.442695
        %v1023 = vpow.pop %v1022
        %v1024 = vmul.f32 %v900, 1.442695
        %v1025 = vpow.pop %v1024
        %v1026 = vmul.f32 %v901, 1.442695
        %v1027 = vpow.pop %v1026
        %v1028 = vmul.f32 %v902, 1.442695
        %v1029 = vpow.pop %v1028
        %v1030 = vmul.f32 %v903, 1.442695
        %v1031 = vpow.pop %v1030
        %v1032 = vadd.f32 %v905, %v909
        %v1033 = vadd.f32 %v1032, %v913
        %v1034 = vadd.f32 %v1033, %v917
        %v1035 = vadd.f32 %v1034, %v921
        %v1036 = vadd.f32 %v1035, %v925
        %v1037 = vadd.f32 %v1036, %v929
        %v1038 = vadd.f32 %v1037, %v933
        %v1039 = vadd.f32 %v1038, %v937
        %v1040 = vadd.f32 %v1039, %v941
        %v1041 = vadd.f32 %v1040, %v945
        %v1042 = vadd.f32 %v1041, %v949
        %v1043 = vadd.f32 %v1042, %v953
        %v1044 = vadd.f32 %v1043, %v957
        %v1045 = vadd.f32 %v1044, %v961
        %v1046 = vadd.f32 %v1045, %v965
        %v1047 = vadd.f32 %v1046, %v969
        %v1048 = vadd.f32 %v1047, %v973
        %v1049 = vadd.f32 %v1048, %v977
        %v1050 = vadd.f32 %v1049, %v981
        %v1051 = vadd.f32 %v1050, %v985
        %v1052 = vadd.f32 %v1051, %v989
        %v1053 = vadd.f32 %v1052, %v993
        %v1054 = vadd.f32 %v1053, %v997
        %v1055 = vadd.f32 %v1054, %v1001
        %v1056 = vadd.f32 %v1055, %v1005
        %v1057 = vadd.f32 %v1056, %v1009
        %v1058 = vadd.f32 %v1057, %v1013
        %v1059 = vadd.f32 %v1058, %v1017
        %v1060 = vadd.f32 %v1059, %v1021
        %v1061 = vadd.f32 %v1060, %v1025
        %v1062 = vadd.f32 %v1061, %v1029
        %v1063 = vrot.slane %v1062, 4
        %v1064 = vadd.f32 %v1062, %v1063
        %v1065 = vrot.slane %v1064, 2
        %v1066 = vadd.f32 %v1064, %v1065
        %v1067 = vrot.slane %v1066, 1
        %v1068 = vadd.f32 %v1066, %v1067
        %v1069 = vadd.f32 %v907, %v911
        %v1070 = vadd.f32 %v1069, %v915
        %v1071 = vadd.f32 %v1070, %v919
        %v1072 = vadd.f32 %v1071, %v923
        %v1073 = vadd.f32 %v1072, %v927
        %v1074 = vadd.f32 %v1073, %v931
        %v1075 = vadd.f32 %v1074, %v935
        %v1076 = vadd.f32 %v1075, %v939
        %v1077 = vadd.f32 %v1076, %v943
        %v1078 = vadd.f32 %v1077, %v947
        %v1079 = vadd.f32 %v1078, %v951
        %v1080 = vadd.f32 %v1079, %v955
        %v1081 = vadd.f32 %v1080, %v959
        %v1082 = vadd.f32 %v1081, %v963
        %v1083 = vadd.f32 %v1082, %v967
        %v1084 = vadd.f32 %v1083, %v971
        %v1085 = vadd.f32 %v1084, %v975
        %v1086 = vadd.f32 %v1085, %v979
        %v1087 = vadd.f32 %v1086, %v983
        %v1088 = vadd.f32 %v1087, %v987
        %v1089 = vadd.f32 %v1088, %v991
        %v1090 = vadd.f32 %v1089, %v995
        %v1091 = vadd.f32 %v1090, %v999
        %v1092 = vadd.f32 %v1091, %v1003
        %v1093 = vadd.f32 %v1092, %v1007
        %v1094 = vadd.f32 %v1093, %v1011
        %v1095 = vadd.f32 %v1094, %v1015
        %v1096 = vadd.f32 %v1095, %v1019
        %v1097 = vadd.f32 %v1096, %v1023
        %v1098 = vadd.f32 %v1097, %v1027
        %v1099 = vadd.f32 %v1098, %v1031
        %v1100 = vrot.slane %v1099, 4
        %v1101 = vadd.f32 %v1099, %v1100
        %v1102 = vrot.slane %v1101, 2
        %v1103 = vadd.f32 %v1101, %v1102
        %v1104 = vrot.slane %v1103, 1
        %v1105 = vadd.f32 %v1103, %v1104
        %v1106 = vpack.c.bf16 %v909, %v905
        %v1107 = vpack.c.bf16 %v911, %v907
        %v1108 = vpack.c.bf16 %v917, %v913
        %v1109 = vpack.c.bf16 %v919, %v915
        %v1110 = vpack.c.bf16 %v925, %v921
        %v1111 = vpack.c.bf16 %v927, %v923
        %v1112 = vpack.c.bf16 %v933, %v929
        %v1113 = vpack.c.bf16 %v935, %v931
        %v1114 = vpack.c.bf16 %v941, %v937
        %v1115 = vpack.c.bf16 %v943, %v939
        %v1116 = vpack.c.bf16 %v949, %v945
        %v1117 = vpack.c.bf16 %v951, %v947
        %v1118 = vpack.c.bf16 %v957, %v953
        %v1119 = vpack.c.bf16 %v959, %v955
        %v1120 = vpack.c.bf16 %v965, %v961
        %v1121 = vpack.c.bf16 %v967, %v963
        %v1122 = vpack.c.bf16 %v973, %v969
        %v1123 = vpack.c.bf16 %v975, %v971
        %v1124 = vpack.c.bf16 %v981, %v977
        %v1125 = vpack.c.bf16 %v983, %v979
        %v1126 = vpack.c.bf16 %v989, %v985
        %v1127 = vpack.c.bf16 %v991, %v987
        %v1128 = vpack.c.bf16 %v997, %v993
        %v1129 = vpack.c.bf16 %v999, %v995
        %v1130 = vpack.c.bf16 %v1005, %v1001
        %v1131 = vpack.c.bf16 %v1007, %v1003
        %v1132 = vpack.c.bf16 %v1013, %v1009
        %v1133 = vpack.c.bf16 %v1015, %v1011
        %v1134 = vpack.c.bf16 %v1021, %v1017
        %v1135 = vpack.c.bf16 %v1023, %v1019
        %v1136 = vpack.c.bf16 %v1029, %v1025
        %v1137 = vpack.c.bf16 %v1031, %v1027
        %v1139 = vunpack.c.l.b16 %v479
        %v1140 = vunpack.c.h.b16 %v479
        %v1141 = vpack.c.b16 %v1139, %v1139
        %v1142 = vpack.c.b16 %v1140, %v1140
        %1145 = vmatprep.subr.bf16.mxu0 %v1121
        %1146 = vmatpush1.bf16.msra.mxu0 %v1120
        %1147 = vmatprep.subr.bf16.mxu0 %v1119
        %1148 = vmatpush1.bf16.msra.mxu0 %v1118
        %1149 = vmatprep.subr.bf16.mxu0 %v1117
        %1150 = vmatpush1.bf16.msra.mxu0 %v1116
        %1151 = vmatprep.subr.bf16.mxu0 %v1115
        %1152 = vmatpush1.bf16.msra.mxu0 %v1114
        %1153 = vmatprep.subr.bf16.mxu0 %v1113
        %1154 = vmatpush1.bf16.msra.mxu0 %v1112
        %1155 = vmatprep.subr.bf16.mxu0 %v1111
        %1156 = vmatpush1.bf16.msra.mxu0 %v1110
        %1157 = vmatprep.subr.bf16.mxu0 %v1109
        %1158 = vmatpush1.bf16.msra.mxu0 %v1108
        %1159 = vmatprep.subr.bf16.mxu0 %v1107
        %1160 = vmatpush1.bf16.msra.mxu0 %v1106
        %1161 = vmatprep.subr.bf16.mxu0 %v1137
        %1162 = vmatpush2.bf16.msra.mxu0 %v1136
        %1163 = vmatprep.subr.bf16.mxu0 %v1135
        %1164 = vmatpush2.bf16.msra.mxu0 %v1134
        %1165 = vmatprep.subr.bf16.mxu0 %v1133
        %1166 = vmatpush2.bf16.msra.mxu0 %v1132
        %1167 = vmatprep.subr.bf16.mxu0 %v1131
        %1168 = vmatpush2.bf16.msra.mxu0 %v1130
        %1169 = vmatprep.subr.bf16.mxu0 %v1129
        %1170 = vmatpush2.bf16.msra.mxu0 %v1128
        %1171 = vmatprep.subr.bf16.mxu0 %v1127
        %1172 = vmatpush2.bf16.msra.mxu0 %v1126
        %1173 = vmatprep.subr.bf16.mxu0 %v1125
        %1174 = vmatpush2.bf16.msra.mxu0 %v1124
        %1175 = vmatprep.subr.bf16.mxu0 %v1123
        %1176 = vmatpush2.bf16.msra.mxu0 %v1122
        %1177 = vmatprep.mubr.bf16.mxu0 %v1142
        %1178 = vmatmul.mubr.bf16.gmra.mxu0 %v1141
        %v1179 = vpop.f32.mrf.mxu0
        %v1180 = vadd.f32 0.0, %v1179
        %v1181 = vpop.f32.mrf.mxu0
        %v1182 = vadd.f32 0.0, %v1181
        %v1183 = vpop.f32.mrf.mxu0
        %v1184 = vpop.f32.mrf.mxu0
        %1185 = vdwg.mxu0
        %v1186 = vrcp.pop %v1068
        %v1187 = vrcp.pop %v1105
        %v1188 = vmul.f32 %v1180, %v1186
        %v1189 = vmul.f32 %v1182, %v1187
        %v1190 = vpack.c.bf16 %v1188, %v1188
        %v1191 = vpack.c.bf16 %v1189, %v1189
        %v1194 = vunpack.c.l.b16 %v1190
        %v1195 = vunpack.c.l.b16 %v1191
        %v1196 = vpack.c.b16 %v1195, %v1194
        %1198 = vst [vmem:[#allocation3] sm:$0xff] %v1196
        %v1199 = vpack.c.bf16 %v472, %v472
        %v1200 = vpack.c.bf16 %v474, %v474
        %v1201 = vld [vmem:[#allocation2 + $0x8] sm:$0xff]
        %v1202 = vld [vmem:[#allocation2 + $0x18] sm:$0xff]
        %v1204 = vunpack.c.l.b16 %v1201
        %v1205 = vunpack.c.h.b16 %v1201
        %v1206 = vpack.c.b16 %v1204, %v1204
        %v1207 = vpack.c.b16 %v1205, %v1205
        %1210 = vxpose.xlu0.c.b16.start [1/8] %v1206, 128
        %1211 = vxpose.xlu0.c.b16.cont [2/8] 0, 128
        %1212 = vxpose.xlu0.c.b16.cont [3/8] 0, 128
        %1213 = vxpose.xlu0.c.b16.cont [4/8] 0, 128
        %1214 = vxpose.xlu0.c.b16.cont [5/8] 0, 128
        %1215 = vxpose.xlu0.c.b16.cont [6/8] 0, 128
        %1216 = vxpose.xlu0.c.b16.cont [7/8] 0, 128
        %1217 = vxpose.xlu0.c.b16.end [8/8] 0, 128
        %v1218 = vpop.trf.xlu0
        %v1219 = vpop.trf.xlu0
        %v1220 = vpop.trf.xlu0
        %v1221 = vpop.trf.xlu0
        %v1222 = vpop.trf.xlu0
        %v1223 = vpop.trf.xlu0
        %v1224 = vpop.trf.xlu0
        %v1225 = vpop.trf.xlu0
        %1226 = vxpose.xlu0.c.b16.start [1/8] %v1207, 128
        %1227 = vxpose.xlu0.c.b16.cont [2/8] 0, 128
        %1228 = vxpose.xlu0.c.b16.cont [3/8] 0, 128
        %1229 = vxpose.xlu0.c.b16.cont [4/8] 0, 128
        %1230 = vxpose.xlu0.c.b16.cont [5/8] 0, 128
        %1231 = vxpose.xlu0.c.b16.cont [6/8] 0, 128
        %1232 = vxpose.xlu0.c.b16.cont [7/8] 0, 128
        %1233 = vxpose.xlu0.c.b16.end [8/8] 0, 128
        %v1234 = vpop.trf.xlu0
        %v1235 = vpop.trf.xlu0
        %v1236 = vpop.trf.xlu0
        %v1237 = vpop.trf.xlu0
        %v1238 = vpop.trf.xlu0
        %v1239 = vpop.trf.xlu0
        %v1240 = vpop.trf.xlu0
        %v1241 = vpop.trf.xlu0
        %v1243 = vsel %vm422, %v1218, 0
        %v1246 = vsel %vm422, %v1219, 0
        %v1249 = vsel %vm422, %v1220, 0
        %v1252 = vsel %vm422, %v1221, 0
        %v1255 = vsel %vm422, %v1222, 0
        %v1258 = vsel %vm422, %v1223, 0
        %v1261 = vsel %vm422, %v1224, 0
        %v1264 = vsel %vm422, %v1225, 0
        %v1267 = vsel %vm422, %v1234, 0
        %v1270 = vsel %vm422, %v1235, 0
        %v1273 = vsel %vm422, %v1236, 0
        %v1276 = vsel %vm422, %v1237, 0
        %v1279 = vsel %vm422, %v1238, 0
        %v1282 = vsel %vm422, %v1239, 0
        %v1285 = vsel %vm422, %v1240, 0
        %v1288 = vsel %vm422, %v1241, 0
        %v1291 = vsel %vm426, %v1199, 0
        %v1294 = vsel %vm426, %v1200, 0
        %1296 = vmatprep.subr.bf16.mxu0 0
        %1297 = vmatpush1.bf16.msra.mxu0 0
        %1298 = vmatprep.subr.bf16.mxu0 0
        %1299 = vmatpush1.bf16.msra.mxu0 0
        %1300 = vmatprep.subr.bf16.mxu0 0
        %1301 = vmatpush1.bf16.msra.mxu0 0
        %1302 = vmatprep.subr.bf16.mxu0 0
        %1303 = vmatpush1.bf16.msra.mxu0 0
        %1304 = vmatprep.subr.bf16.mxu0 0
        %1305 = vmatpush1.bf16.msra.mxu0 0
        %1306 = vmatprep.subr.bf16.mxu0 0
        %1307 = vmatpush1.bf16.msra.mxu0 0
        %1308 = vmatprep.subr.bf16.mxu0 0
        %1309 = vmatpush1.bf16.msra.mxu0 0
        %1310 = vmatprep.subr.bf16.mxu0 %v1294
        %1311 = vmatpush1.bf16.msra.mxu0 %v1291
        %1312 = vmatprep.subr.bf16.mxu0 0
        %1313 = vmatpush2.bf16.msra.mxu0 0
        %1314 = vmatprep.subr.bf16.mxu0 0
        %1315 = vmatpush2.bf16.msra.mxu0 0
        %1316 = vmatprep.subr.bf16.mxu0 0
        %1317 = vmatpush2.bf16.msra.mxu0 0
        %1318 = vmatprep.subr.bf16.mxu0 0
        %1319 = vmatpush2.bf16.msra.mxu0 0
        %1320 = vmatprep.subr.bf16.mxu0 0
        %1321 = vmatpush2.bf16.msra.mxu0 0
        %1322 = vmatprep.subr.bf16.mxu0 0
        %1323 = vmatpush2.bf16.msra.mxu0 0
        %1324 = vmatprep.subr.bf16.mxu0 0
        %1325 = vmatpush2.bf16.msra.mxu0 0
        %1326 = vmatprep.subr.bf16.mxu0 0
        %1327 = vmatpush2.bf16.msra.mxu0 0
        %1328 = vmatprep.mubr.bf16.mxu0 0
        %1329 = vmatmul.mubr.bf16.gmra.mxu0 %v1243
        %v1330 = vpop.f32.mrf.mxu0
        %v1331 = vadd.f32 0.0, %v1330
        %v1332 = vpop.f32.mrf.mxu0
        %v1333 = vadd.f32 0.0, %v1332
        %v1334 = vpop.f32.mrf.mxu0
        %v1335 = vadd.f32 0.0, %v1334
        %v1336 = vpop.f32.mrf.mxu0
        %v1337 = vadd.f32 0.0, %v1336
        %1338 = vmatprep.mubr.bf16.mxu0 0
        %1339 = vmatmul.mubr.bf16.gmra.mxu0 %v1246
        %v1340 = vpop.f32.mrf.mxu0
        %v1341 = vadd.f32 0.0, %v1340
        %v1342 = vpop.f32.mrf.mxu0
        %v1343 = vadd.f32 0.0, %v1342
        %v1344 = vpop.f32.mrf.mxu0
        %v1345 = vadd.f32 0.0, %v1344
        %v1346 = vpop.f32.mrf.mxu0
        %v1347 = vadd.f32 0.0, %v1346
        %1348 = vmatprep.mubr.bf16.mxu0 0
        %1349 = vmatmul.mubr.bf16.gmra.mxu0 %v1249
        %v1350 = vpop.f32.mrf.mxu0
        %v1351 = vadd.f32 0.0, %v1350
        %v1352 = vpop.f32.mrf.mxu0
        %v1353 = vadd.f32 0.0, %v1352
        %v1354 = vpop.f32.mrf.mxu0
        %v1355 = vadd.f32 0.0, %v1354
        %v1356 = vpop.f32.mrf.mxu0
        %v1357 = vadd.f32 0.0, %v1356
        %1358 = vmatprep.mubr.bf16.mxu0 0
        %1359 = vmatmul.mubr.bf16.gmra.mxu0 %v1252
        %v1360 = vpop.f32.mrf.mxu0
        %v1361 = vadd.f32 0.0, %v1360
        %v1362 = vpop.f32.mrf.mxu0
        %v1363 = vadd.f32 0.0, %v1362
        %v1364 = vpop.f32.mrf.mxu0
        %v1365 = vadd.f32 0.0, %v1364
        %v1366 = vpop.f32.mrf.mxu0
        %v1367 = vadd.f32 0.0, %v1366
        %1368 = vmatprep.mubr.bf16.mxu0 0
        %1369 = vmatmul.mubr.bf16.gmra.mxu0 %v1255
        %v1370 = vpop.f32.mrf.mxu0
        %v1371 = vadd.f32 0.0, %v1370
        %v1372 = vpop.f32.mrf.mxu0
        %v1373 = vadd.f32 0.0, %v1372
        %v1374 = vpop.f32.mrf.mxu0
        %v1375 = vadd.f32 0.0, %v1374
        %v1376 = vpop.f32.mrf.mxu0
        %v1377 = vadd.f32 0.0, %v1376
        %1378 = vmatprep.mubr.bf16.mxu0 0
        %1379 = vmatmul.mubr.bf16.gmra.mxu0 %v1258
        %v1380 = vpop.f32.mrf.mxu0
        %v1381 = vadd.f32 0.0, %v1380
        %v1382 = vpop.f32.mrf.mxu0
        %v1383 = vadd.f32 0.0, %v1382
        %v1384 = vpop.f32.mrf.mxu0
        %v1385 = vadd.f32 0.0, %v1384
        %v1386 = vpop.f32.mrf.mxu0
        %v1387 = vadd.f32 0.0, %v1386
        %1388 = vmatprep.mubr.bf16.mxu0 0
        %1389 = vmatmul.mubr.bf16.gmra.mxu0 %v1261
        %v1390 = vpop.f32.mrf.mxu0
        %v1391 = vadd.f32 0.0, %v1390
        %v1392 = vpop.f32.mrf.mxu0
        %v1393 = vadd.f32 0.0, %v1392
        %v1394 = vpop.f32.mrf.mxu0
        %v1395 = vadd.f32 0.0, %v1394
        %v1396 = vpop.f32.mrf.mxu0
        %v1397 = vadd.f32 0.0, %v1396
        %1398 = vmatprep.mubr.bf16.mxu0 0
        %1399 = vmatmul.mubr.bf16.gmra.mxu0 %v1264
        %v1400 = vpop.f32.mrf.mxu0
        %v1401 = vadd.f32 0.0, %v1400
        %v1402 = vpop.f32.mrf.mxu0
        %v1403 = vadd.f32 0.0, %v1402
        %v1404 = vpop.f32.mrf.mxu0
        %v1405 = vadd.f32 0.0, %v1404
        %v1406 = vpop.f32.mrf.mxu0
        %v1407 = vadd.f32 0.0, %v1406
        %1408 = vmatprep.mubr.bf16.mxu0 0
        %1409 = vmatmul.mubr.bf16.gmra.mxu0 %v1267
        %v1410 = vpop.f32.mrf.mxu0
        %v1411 = vadd.f32 0.0, %v1410
        %v1412 = vpop.f32.mrf.mxu0
        %v1413 = vadd.f32 0.0, %v1412
        %v1414 = vpop.f32.mrf.mxu0
        %v1415 = vadd.f32 0.0, %v1414
        %v1416 = vpop.f32.mrf.mxu0
        %v1417 = vadd.f32 0.0, %v1416
        %1418 = vmatprep.mubr.bf16.mxu0 0
        %1419 = vmatmul.mubr.bf16.gmra.mxu0 %v1270
        %v1420 = vpop.f32.mrf.mxu0
        %v1421 = vadd.f32 0.0, %v1420
        %v1422 = vpop.f32.mrf.mxu0
        %v1423 = vadd.f32 0.0, %v1422
        %v1424 = vpop.f32.mrf.mxu0
        %v1425 = vadd.f32 0.0, %v1424
        %v1426 = vpop.f32.mrf.mxu0
        %v1427 = vadd.f32 0.0, %v1426
        %1428 = vmatprep.mubr.bf16.mxu0 0
        %1429 = vmatmul.mubr.bf16.gmra.mxu0 %v1273
        %v1430 = vpop.f32.mrf.mxu0
        %v1431 = vadd.f32 0.0, %v1430
        %v1432 = vpop.f32.mrf.mxu0
        %v1433 = vadd.f32 0.0, %v1432
        %v1434 = vpop.f32.mrf.mxu0
        %v1435 = vadd.f32 0.0, %v1434
        %v1436 = vpop.f32.mrf.mxu0
        %v1437 = vadd.f32 0.0, %v1436
        %1438 = vmatprep.mubr.bf16.mxu0 0
        %1439 = vmatmul.mubr.bf16.gmra.mxu0 %v1276
        %v1440 = vpop.f32.mrf.mxu0
        %v1441 = vadd.f32 0.0, %v1440
        %v1442 = vpop.f32.mrf.mxu0
        %v1443 = vadd.f32 0.0, %v1442
        %v1444 = vpop.f32.mrf.mxu0
        %v1445 = vadd.f32 0.0, %v1444
        %v1446 = vpop.f32.mrf.mxu0
        %v1447 = vadd.f32 0.0, %v1446
        %1448 = vmatprep.mubr.bf16.mxu0 0
        %1449 = vmatmul.mubr.bf16.gmra.mxu0 %v1279
        %v1450 = vpop.f32.mrf.mxu0
        %v1451 = vadd.f32 0.0, %v1450
        %v1452 = vpop.f32.mrf.mxu0
        %v1453 = vadd.f32 0.0, %v1452
        %v1454 = vpop.f32.mrf.mxu0
        %v1455 = vadd.f32 0.0, %v1454
        %v1456 = vpop.f32.mrf.mxu0
        %v1457 = vadd.f32 0.0, %v1456
        %1458 = vmatprep.mubr.bf16.mxu0 0
        %1459 = vmatmul.mubr.bf16.gmra.mxu0 %v1282
        %v1460 = vpop.f32.mrf.mxu0
        %v1461 = vadd.f32 0.0, %v1460
        %v1462 = vpop.f32.mrf.mxu0
        %v1463 = vadd.f32 0.0, %v1462
        %v1464 = vpop.f32.mrf.mxu0
        %v1465 = vadd.f32 0.0, %v1464
        %v1466 = vpop.f32.mrf.mxu0
        %v1467 = vadd.f32 0.0, %v1466
        %1468 = vmatprep.mubr.bf16.mxu0 0
        %1469 = vmatmul.mubr.bf16.gmra.mxu0 %v1285
        %v1470 = vpop.f32.mrf.mxu0
        %v1471 = vadd.f32 0.0, %v1470
        %v1472 = vpop.f32.mrf.mxu0
        %v1473 = vadd.f32 0.0, %v1472
        %v1474 = vpop.f32.mrf.mxu0
        %v1475 = vadd.f32 0.0, %v1474
        %v1476 = vpop.f32.mrf.mxu0
        %v1477 = vadd.f32 0.0, %v1476
        %1478 = vmatprep.mubr.bf16.mxu0 0
        %1479 = vmatmul.mubr.bf16.gmra.mxu0 %v1288
        %v1480 = vpop.f32.mrf.mxu0
        %v1481 = vadd.f32 0.0, %v1480
        %v1482 = vpop.f32.mrf.mxu0
        %v1483 = vadd.f32 0.0, %v1482
        %v1484 = vpop.f32.mrf.mxu0
        %v1485 = vadd.f32 0.0, %v1484
        %v1486 = vpop.f32.mrf.mxu0
        %v1487 = vadd.f32 0.0, %v1486
        %1488 = vdwg.mxu0
        %v1489 = vmax.f32 %v1331, %v1341
        %v1490 = vmax.f32 %v1335, %v1345
        %v1491 = vmax.f32 %v1489, %v1351
        %v1492 = vmax.f32 %v1490, %v1355
        %v1493 = vmax.f32 %v1491, %v1361
        %v1494 = vmax.f32 %v1492, %v1365
        %v1495 = vmax.f32 %v1493, %v1371
        %v1496 = vmax.f32 %v1494, %v1375
        %v1497 = vmax.f32 %v1495, %v1381
        %v1498 = vmax.f32 %v1496, %v1385
        %v1499 = vmax.f32 %v1497, %v1391
        %v1500 = vmax.f32 %v1498, %v1395
        %v1501 = vmax.f32 %v1499, %v1401
        %v1502 = vmax.f32 %v1500, %v1405
        %v1503 = vmax.f32 %v1501, %v1411
        %v1504 = vmax.f32 %v1502, %v1415
        %v1505 = vmax.f32 %v1503, %v1421
        %v1506 = vmax.f32 %v1504, %v1425
        %v1507 = vmax.f32 %v1505, %v1431
        %v1508 = vmax.f32 %v1506, %v1435
        %v1509 = vmax.f32 %v1507, %v1441
        %v1510 = vmax.f32 %v1508, %v1445
        %v1511 = vmax.f32 %v1509, %v1451
        %v1512 = vmax.f32 %v1510, %v1455
        %v1513 = vmax.f32 %v1511, %v1461
        %v1514 = vmax.f32 %v1512, %v1465
        %v1515 = vmax.f32 %v1513, %v1471
        %v1516 = vmax.f32 %v1514, %v1475
        %v1517 = vmax.f32 %v1515, %v1481
        %v1518 = vmax.f32 %v1516, %v1485
        %v1519 = vmax.f32 %v1517, %v1518
        %v1520 = vrot.slane %v1519, 4
        %v1521 = vmax.f32 %v1519, %v1520
        %v1522 = vrot.slane %v1521, 2
        %v1523 = vmax.f32 %v1521, %v1522
        %v1524 = vrot.slane %v1523, 1
        %v1525 = vmax.f32 %v1523, %v1524
        %v1526 = vmax.f32 %v1333, %v1343
        %v1527 = vmax.f32 %v1337, %v1347
        %v1528 = vmax.f32 %v1526, %v1353
        %v1529 = vmax.f32 %v1527, %v1357
        %v1530 = vmax.f32 %v1528, %v1363
        %v1531 = vmax.f32 %v1529, %v1367
        %v1532 = vmax.f32 %v1530, %v1373
        %v1533 = vmax.f32 %v1531, %v1377
        %v1534 = vmax.f32 %v1532, %v1383
        %v1535 = vmax.f32 %v1533, %v1387
        %v1536 = vmax.f32 %v1534, %v1393
        %v1537 = vmax.f32 %v1535, %v1397
        %v1538 = vmax.f32 %v1536, %v1403
        %v1539 = vmax.f32 %v1537, %v1407
        %v1540 = vmax.f32 %v1538, %v1413
        %v1541 = vmax.f32 %v1539, %v1417
        %v1542 = vmax.f32 %v1540, %v1423
        %v1543 = vmax.f32 %v1541, %v1427
        %v1544 = vmax.f32 %v1542, %v1433
        %v1545 = vmax.f32 %v1543, %v1437
        %v1546 = vmax.f32 %v1544, %v1443
        %v1547 = vmax.f32 %v1545, %v1447
        %v1548 = vmax.f32 %v1546, %v1453
        %v1549 = vmax.f32 %v1547, %v1457
        %v1550 = vmax.f32 %v1548, %v1463
        %v1551 = vmax.f32 %v1549, %v1467
        %v1552 = vmax.f32 %v1550, %v1473
        %v1553 = vmax.f32 %v1551, %v1477
        %v1554 = vmax.f32 %v1552, %v1483
        %v1555 = vmax.f32 %v1553, %v1487
        %v1556 = vmax.f32 %v1554, %v1555
        %v1557 = vrot.slane %v1556, 4
        %v1558 = vmax.f32 %v1556, %v1557
        %v1559 = vrot.slane %v1558, 2
        %v1560 = vmax.f32 %v1558, %v1559
        %v1561 = vrot.slane %v1560, 1
        %v1562 = vmax.f32 %v1560, %v1561
        %v1563 = vsub.f32 %v1331, %v1525
        %v1564 = vsub.f32 %v1333, %v1562
        %v1565 = vsub.f32 %v1335, %v1525
        %v1566 = vsub.f32 %v1337, %v1562
        %v1567 = vsub.f32 %v1341, %v1525
        %v1568 = vsub.f32 %v1343, %v1562
        %v1569 = vsub.f32 %v1345, %v1525
        %v1570 = vsub.f32 %v1347, %v1562
        %v1571 = vsub.f32 %v1351, %v1525
        %v1572 = vsub.f32 %v1353, %v1562
        %v1573 = vsub.f32 %v1355, %v1525
        %v1574 = vsub.f32 %v1357, %v1562
        %v1575 = vsub.f32 %v1361, %v1525
        %v1576 = vsub.f32 %v1363, %v1562
        %v1577 = vsub.f32 %v1365, %v1525
        %v1578 = vsub.f32 %v1367, %v1562
        %v1579 = vsub.f32 %v1371, %v1525
        %v1580 = vsub.f32 %v1373, %v1562
        %v1581 = vsub.f32 %v1375, %v1525
        %v1582 = vsub.f32 %v1377, %v1562
        %v1583 = vsub.f32 %v1381, %v1525
        %v1584 = vsub.f32 %v1383, %v1562
        %v1585 = vsub.f32 %v1385, %v1525
        %v1586 = vsub.f32 %v1387, %v1562
        %v1587 = vsub.f32 %v1391, %v1525
        %v1588 = vsub.f32 %v1393, %v1562
        %v1589 = vsub.f32 %v1395, %v1525
        %v1590 = vsub.f32 %v1397, %v1562
        %v1591 = vsub.f32 %v1401, %v1525
        %v1592 = vsub.f32 %v1403, %v1562
        %v1593 = vsub.f32 %v1405, %v1525
        %v1594 = vsub.f32 %v1407, %v1562
        %v1595 = vsub.f32 %v1411, %v1525
        %v1596 = vsub.f32 %v1413, %v1562
        %v1597 = vsub.f32 %v1415, %v1525
        %v1598 = vsub.f32 %v1417, %v1562
        %v1599 = vsub.f32 %v1421, %v1525
        %v1600 = vsub.f32 %v1423, %v1562
        %v1601 = vsub.f32 %v1425, %v1525
        %v1602 = vsub.f32 %v1427, %v1562
        %v1603 = vsub.f32 %v1431, %v1525
        %v1604 = vsub.f32 %v1433, %v1562
        %v1605 = vsub.f32 %v1435, %v1525
        %v1606 = vsub.f32 %v1437, %v1562
        %v1607 = vsub.f32 %v1441, %v1525
        %v1608 = vsub.f32 %v1443, %v1562
        %v1609 = vsub.f32 %v1445, %v1525
        %v1610 = vsub.f32 %v1447, %v1562
        %v1611 = vsub.f32 %v1451, %v1525
        %v1612 = vsub.f32 %v1453, %v1562
        %v1613 = vsub.f32 %v1455, %v1525
        %v1614 = vsub.f32 %v1457, %v1562
        %v1615 = vsub.f32 %v1461, %v1525
        %v1616 = vsub.f32 %v1463, %v1562
        %v1617 = vsub.f32 %v1465, %v1525
        %v1618 = vsub.f32 %v1467, %v1562
        %v1619 = vsub.f32 %v1471, %v1525
        %v1620 = vsub.f32 %v1473, %v1562
        %v1621 = vsub.f32 %v1475, %v1525
        %v1622 = vsub.f32 %v1477, %v1562
        %v1623 = vsub.f32 %v1481, %v1525
        %v1624 = vsub.f32 %v1483, %v1562
        %v1625 = vsub.f32 %v1485, %v1525
        %v1626 = vsub.f32 %v1487, %v1562
        %v1627 = vmul.f32 %v1563, 1.442695
        %v1628 = vpow.pop %v1627
        %v1629 = vmul.f32 %v1564, 1.442695
        %v1630 = vpow.pop %v1629
        %v1631 = vmul.f32 %v1565, 1.442695
        %v1632 = vpow.pop %v1631
        %v1633 = vmul.f32 %v1566, 1.442695
        %v1634 = vpow.pop %v1633
        %v1635 = vmul.f32 %v1567, 1.442695
        %v1636 = vpow.pop %v1635
        %v1637 = vmul.f32 %v1568, 1.442695
        %v1638 = vpow.pop %v1637
        %v1639 = vmul.f32 %v1569, 1.442695
        %v1640 = vpow.pop %v1639
        %v1641 = vmul.f32 %v1570, 1.442695
        %v1642 = vpow.pop %v1641
        %v1643 = vmul.f32 %v1571, 1.442695
        %v1644 = vpow.pop %v1643
        %v1645 = vmul.f32 %v1572, 1.442695
        %v1646 = vpow.pop %v1645
        %v1647 = vmul.f32 %v1573, 1.442695
        %v1648 = vpow.pop %v1647
        %v1649 = vmul.f32 %v1574, 1.442695
        %v1650 = vpow.pop %v1649
        %v1651 = vmul.f32 %v1575, 1.442695
        %v1652 = vpow.pop %v1651
        %v1653 = vmul.f32 %v1576, 1.442695
        %v1654 = vpow.pop %v1653
        %v1655 = vmul.f32 %v1577, 1.442695
        %v1656 = vpow.pop %v1655
        %v1657 = vmul.f32 %v1578, 1.442695
        %v1658 = vpow.pop %v1657
        %v1659 = vmul.f32 %v1579, 1.442695
        %v1660 = vpow.pop %v1659
        %v1661 = vmul.f32 %v1580, 1.442695
        %v1662 = vpow.pop %v1661
        %v1663 = vmul.f32 %v1581, 1.442695
        %v1664 = vpow.pop %v1663
        %v1665 = vmul.f32 %v1582, 1.442695
        %v1666 = vpow.pop %v1665
        %v1667 = vmul.f32 %v1583, 1.442695
        %v1668 = vpow.pop %v1667
        %v1669 = vmul.f32 %v1584, 1.442695
        %v1670 = vpow.pop %v1669
        %v1671 = vmul.f32 %v1585, 1.442695
        %v1672 = vpow.pop %v1671
        %v1673 = vmul.f32 %v1586, 1.442695
        %v1674 = vpow.pop %v1673
        %v1675 = vmul.f32 %v1587, 1.442695
        %v1676 = vpow.pop %v1675
        %v1677 = vmul.f32 %v1588, 1.442695
        %v1678 = vpow.pop %v1677
        %v1679 = vmul.f32 %v1589, 1.442695
        %v1680 = vpow.pop %v1679
        %v1681 = vmul.f32 %v1590, 1.442695
        %v1682 = vpow.pop %v1681
        %v1683 = vmul.f32 %v1591, 1.442695
        %v1684 = vpow.pop %v1683
        %v1685 = vmul.f32 %v1592, 1.442695
        %v1686 = vpow.pop %v1685
        %v1687 = vmul.f32 %v1593, 1.442695
        %v1688 = vpow.pop %v1687
        %v1689 = vmul.f32 %v1594, 1.442695
        %v1690 = vpow.pop %v1689
        %v1691 = vmul.f32 %v1595, 1.442695
        %v1692 = vpow.pop %v1691
        %v1693 = vmul.f32 %v1596, 1.442695
        %v1694 = vpow.pop %v1693
        %v1695 = vmul.f32 %v1597, 1.442695
        %v1696 = vpow.pop %v1695
        %v1697 = vmul.f32 %v1598, 1.442695
        %v1698 = vpow.pop %v1697
        %v1699 = vmul.f32 %v1599, 1.442695
        %v1700 = vpow.pop %v1699
        %v1701 = vmul.f32 %v1600, 1.442695
        %v1702 = vpow.pop %v1701
        %v1703 = vmul.f32 %v1601, 1.442695
        %v1704 = vpow.pop %v1703
        %v1705 = vmul.f32 %v1602, 1.442695
        %v1706 = vpow.pop %v1705
        %v1707 = vmul.f32 %v1603, 1.442695
        %v1708 = vpow.pop %v1707
        %v1709 = vmul.f32 %v1604, 1.442695
        %v1710 = vpow.pop %v1709
        %v1711 = vmul.f32 %v1605, 1.442695
        %v1712 = vpow.pop %v1711
        %v1713 = vmul.f32 %v1606, 1.442695
        %v1714 = vpow.pop %v1713
        %v1715 = vmul.f32 %v1607, 1.442695
        %v1716 = vpow.pop %v1715
        %v1717 = vmul.f32 %v1608, 1.442695
        %v1718 = vpow.pop %v1717
        %v1719 = vmul.f32 %v1609, 1.442695
        %v1720 = vpow.pop %v1719
        %v1721 = vmul.f32 %v1610, 1.442695
        %v1722 = vpow.pop %v1721
        %v1723 = vmul.f32 %v1611, 1.442695
        %v1724 = vpow.pop %v1723
        %v1725 = vmul.f32 %v1612, 1.442695
        %v1726 = vpow.pop %v1725
        %v1727 = vmul.f32 %v1613, 1.442695
        %v1728 = vpow.pop %v1727
        %v1729 = vmul.f32 %v1614, 1.442695
        %v1730 = vpow.pop %v1729
        %v1731 = vmul.f32 %v1615, 1.442695
        %v1732 = vpow.pop %v1731
        %v1733 = vmul.f32 %v1616, 1.442695
        %v1734 = vpow.pop %v1733
        %v1735 = vmul.f32 %v1617, 1.442695
        %v1736 = vpow.pop %v1735
        %v1737 = vmul.f32 %v1618, 1.442695
        %v1738 = vpow.pop %v1737
        %v1739 = vmul.f32 %v1619, 1.442695
        %v1740 = vpow.pop %v1739
        %v1741 = vmul.f32 %v1620, 1.442695
        %v1742 = vpow.pop %v1741
        %v1743 = vmul.f32 %v1621, 1.442695
        %v1744 = vpow.pop %v1743
        %v1745 = vmul.f32 %v1622, 1.442695
        %v1746 = vpow.pop %v1745
        %v1747 = vmul.f32 %v1623, 1.442695
        %v1748 = vpow.pop %v1747
        %v1749 = vmul.f32 %v1624, 1.442695
        %v1750 = vpow.pop %v1749
        %v1751 = vmul.f32 %v1625, 1.442695
        %v1752 = vpow.pop %v1751
        %v1753 = vmul.f32 %v1626, 1.442695
        %v1754 = vpow.pop %v1753
        %v1755 = vadd.f32 %v1628, %v1632
        %v1756 = vadd.f32 %v1755, %v1636
        %v1757 = vadd.f32 %v1756, %v1640
        %v1758 = vadd.f32 %v1757, %v1644
        %v1759 = vadd.f32 %v1758, %v1648
        %v1760 = vadd.f32 %v1759, %v1652
        %v1761 = vadd.f32 %v1760, %v1656
        %v1762 = vadd.f32 %v1761, %v1660
        %v1763 = vadd.f32 %v1762, %v1664
        %v1764 = vadd.f32 %v1763, %v1668
        %v1765 = vadd.f32 %v1764, %v1672
        %v1766 = vadd.f32 %v1765, %v1676
        %v1767 = vadd.f32 %v1766, %v1680
        %v1768 = vadd.f32 %v1767, %v1684
        %v1769 = vadd.f32 %v1768, %v1688
        %v1770 = vadd.f32 %v1769, %v1692
        %v1771 = vadd.f32 %v1770, %v1696
        %v1772 = vadd.f32 %v1771, %v1700
        %v1773 = vadd.f32 %v1772, %v1704
        %v1774 = vadd.f32 %v1773, %v1708
        %v1775 = vadd.f32 %v1774, %v1712
        %v1776 = vadd.f32 %v1775, %v1716
        %v1777 = vadd.f32 %v1776, %v1720
        %v1778 = vadd.f32 %v1777, %v1724
        %v1779 = vadd.f32 %v1778, %v1728
        %v1780 = vadd.f32 %v1779, %v1732
        %v1781 = vadd.f32 %v1780, %v1736
        %v1782 = vadd.f32 %v1781, %v1740
        %v1783 = vadd.f32 %v1782, %v1744
        %v1784 = vadd.f32 %v1783, %v1748
        %v1785 = vadd.f32 %v1784, %v1752
        %v1786 = vrot.slane %v1785, 4
        %v1787 = vadd.f32 %v1785, %v1786
        %v1788 = vrot.slane %v1787, 2
        %v1789 = vadd.f32 %v1787, %v1788
        %v1790 = vrot.slane %v1789, 1
        %v1791 = vadd.f32 %v1789, %v1790
        %v1792 = vadd.f32 %v1630, %v1634
        %v1793 = vadd.f32 %v1792, %v1638
        %v1794 = vadd.f32 %v1793, %v1642
        %v1795 = vadd.f32 %v1794, %v1646
        %v1796 = vadd.f32 %v1795, %v1650
        %v1797 = vadd.f32 %v1796, %v1654
        %v1798 = vadd.f32 %v1797, %v1658
        %v1799 = vadd.f32 %v1798, %v1662
        %v1800 = vadd.f32 %v1799, %v1666
        %v1801 = vadd.f32 %v1800, %v1670
        %v1802 = vadd.f32 %v1801, %v1674
        %v1803 = vadd.f32 %v1802, %v1678
        %v1804 = vadd.f32 %v1803, %v1682
        %v1805 = vadd.f32 %v1804, %v1686
        %v1806 = vadd.f32 %v1805, %v1690
        %v1807 = vadd.f32 %v1806, %v1694
        %v1808 = vadd.f32 %v1807, %v1698
        %v1809 = vadd.f32 %v1808, %v1702
        %v1810 = vadd.f32 %v1809, %v1706
        %v1811 = vadd.f32 %v1810, %v1710
        %v1812 = vadd.f32 %v1811, %v1714
        %v1813 = vadd.f32 %v1812, %v1718
        %v1814 = vadd.f32 %v1813, %v1722
        %v1815 = vadd.f32 %v1814, %v1726
        %v1816 = vadd.f32 %v1815, %v1730
        %v1817 = vadd.f32 %v1816, %v1734
        %v1818 = vadd.f32 %v1817, %v1738
        %v1819 = vadd.f32 %v1818, %v1742
        %v1820 = vadd.f32 %v1819, %v1746
        %v1821 = vadd.f32 %v1820, %v1750
        %v1822 = vadd.f32 %v1821, %v1754
        %v1823 = vrot.slane %v1822, 4
        %v1824 = vadd.f32 %v1822, %v1823
        %v1825 = vrot.slane %v1824, 2
        %v1826 = vadd.f32 %v1824, %v1825
        %v1827 = vrot.slane %v1826, 1
        %v1828 = vadd.f32 %v1826, %v1827
        %v1829 = vpack.c.bf16 %v1632, %v1628
        %v1830 = vpack.c.bf16 %v1634, %v1630
        %v1831 = vpack.c.bf16 %v1640, %v1636
        %v1832 = vpack.c.bf16 %v1642, %v1638
        %v1833 = vpack.c.bf16 %v1648, %v1644
        %v1834 = vpack.c.bf16 %v1650, %v1646
        %v1835 = vpack.c.bf16 %v1656, %v1652
        %v1836 = vpack.c.bf16 %v1658, %v1654
        %v1837 = vpack.c.bf16 %v1664, %v1660
        %v1838 = vpack.c.bf16 %v1666, %v1662
        %v1839 = vpack.c.bf16 %v1672, %v1668
        %v1840 = vpack.c.bf16 %v1674, %v1670
        %v1841 = vpack.c.bf16 %v1680, %v1676
        %v1842 = vpack.c.bf16 %v1682, %v1678
        %v1843 = vpack.c.bf16 %v1688, %v1684
        %v1844 = vpack.c.bf16 %v1690, %v1686
        %v1845 = vpack.c.bf16 %v1696, %v1692
        %v1846 = vpack.c.bf16 %v1698, %v1694
        %v1847 = vpack.c.bf16 %v1704, %v1700
        %v1848 = vpack.c.bf16 %v1706, %v1702
        %v1849 = vpack.c.bf16 %v1712, %v1708
        %v1850 = vpack.c.bf16 %v1714, %v1710
        %v1851 = vpack.c.bf16 %v1720, %v1716
        %v1852 = vpack.c.bf16 %v1722, %v1718
        %v1853 = vpack.c.bf16 %v1728, %v1724
        %v1854 = vpack.c.bf16 %v1730, %v1726
        %v1855 = vpack.c.bf16 %v1736, %v1732
        %v1856 = vpack.c.bf16 %v1738, %v1734
        %v1857 = vpack.c.bf16 %v1744, %v1740
        %v1858 = vpack.c.bf16 %v1746, %v1742
        %v1859 = vpack.c.bf16 %v1752, %v1748
        %v1860 = vpack.c.bf16 %v1754, %v1750
        %v1862 = vunpack.c.l.b16 %v1202
        %v1863 = vunpack.c.h.b16 %v1202
        %v1864 = vpack.c.b16 %v1862, %v1862
        %v1865 = vpack.c.b16 %v1863, %v1863
        %1868 = vmatprep.subr.bf16.mxu0 %v1844
        %1869 = vmatpush1.bf16.msra.mxu0 %v1843
        %1870 = vmatprep.subr.bf16.mxu0 %v1842
        %1871 = vmatpush1.bf16.msra.mxu0 %v1841
        %1872 = vmatprep.subr.bf16.mxu0 %v1840
        %1873 = vmatpush1.bf16.msra.mxu0 %v1839
        %1874 = vmatprep.subr.bf16.mxu0 %v1838
        %1875 = vmatpush1.bf16.msra.mxu0 %v1837
        %1876 = vmatprep.subr.bf16.mxu0 %v1836
        %1877 = vmatpush1.bf16.msra.mxu0 %v1835
        %1878 = vmatprep.subr.bf16.mxu0 %v1834
        %1879 = vmatpush1.bf16.msra.mxu0 %v1833
        %1880 = vmatprep.subr.bf16.mxu0 %v1832
        %1881 = vmatpush1.bf16.msra.mxu0 %v1831
        %1882 = vmatprep.subr.bf16.mxu0 %v1830
        %1883 = vmatpush1.bf16.msra.mxu0 %v1829
        %1884 = vmatprep.subr.bf16.mxu0 %v1860
        %1885 = vmatpush2.bf16.msra.mxu0 %v1859
        %1886 = vmatprep.subr.bf16.mxu0 %v1858
        %1887 = vmatpush2.bf16.msra.mxu0 %v1857
        %1888 = vmatprep.subr.bf16.mxu0 %v1856
        %1889 = vmatpush2.bf16.msra.mxu0 %v1855
        %1890 = vmatprep.subr.bf16.mxu0 %v1854
        %1891 = vmatpush2.bf16.msra.mxu0 %v1853
        %1892 = vmatprep.subr.bf16.mxu0 %v1852
        %1893 = vmatpush2.bf16.msra.mxu0 %v1851
        %1894 = vmatprep.subr.bf16.mxu0 %v1850
        %1895 = vmatpush2.bf16.msra.mxu0 %v1849
        %1896 = vmatprep.subr.bf16.mxu0 %v1848
        %1897 = vmatpush2.bf16.msra.mxu0 %v1847
        %1898 = vmatprep.subr.bf16.mxu0 %v1846
        %1899 = vmatpush2.bf16.msra.mxu0 %v1845
        %1900 = vmatprep.mubr.bf16.mxu0 %v1865
        %1901 = vmatmul.mubr.bf16.gmra.mxu0 %v1864
        %v1902 = vpop.f32.mrf.mxu0
        %v1903 = vadd.f32 0.0, %v1902
        %v1904 = vpop.f32.mrf.mxu0
        %v1905 = vadd.f32 0.0, %v1904
        %v1906 = vpop.f32.mrf.mxu0
        %v1907 = vpop.f32.mrf.mxu0
        %1908 = vdwg.mxu0
        %v1909 = vrcp.pop %v1791
        %v1910 = vrcp.pop %v1828
        %v1911 = vmul.f32 %v1903, %v1909
        %v1912 = vmul.f32 %v1905, %v1910
        %v1913 = vpack.c.bf16 %v1911, %v1911
        %v1914 = vpack.c.bf16 %v1912, %v1912
        %v1917 = vunpack.c.l.b16 %v1913
        %v1918 = vunpack.c.l.b16 %v1914
        %v1919 = vpack.c.b16 %v1918, %v1917
        %1921 = vst [vmem:[#allocation3 + $0x8] sm:$0xff] %v1919
        %v1922 = vld [vmem:[%s4] sm:$0xf]
        %v1923 = vld [vmem:[#allocation3] sm:$0xff]
        %v1924 = vld [vmem:[#allocation3 + $0x8] sm:$0xff]
        %v1925 = vld [vmem:[%s5] sm:$0xff]
        %1927 = vset.pattern.permute.xlu0 0
        %1928 = vperm.xlu0 %1927, %v1925
        %v1929 = vpop.permute.xlu0 %1928
        %v1933 = vunpack.c.l.b16 %v1923
        %v1934 = vunpack.c.h.b16 %v1923
        %v1935 = vunpack.c.l.b16 %v1924
        %v1936 = vunpack.c.h.b16 %v1924
        %v1937 = vpack.c.b16 %v1935, %v1933
        %v1938 = vpack.c.b16 %v1936, %v1934
        %vm1941 = vcmask 130048
        %v1943 = vsel %vm1941, %v1922, 0
        %1945 = vmatprep.subr.bf16.mxu0 0
        %1946 = vmatpush1.bf16.msra.mxu0 0
        %1947 = vmatprep.subr.bf16.mxu0 0
        %1948 = vmatpush1.bf16.msra.mxu0 0
        %1949 = vmatprep.subr.bf16.mxu0 0
        %1950 = vmatpush1.bf16.msra.mxu0 0
        %1951 = vmatprep.subr.bf16.mxu0 0
        %1952 = vmatpush1.bf16.msra.mxu0 0
        %1953 = vmatprep.subr.bf16.mxu0 0
        %1954 = vmatpush1.bf16.msra.mxu0 0
        %1955 = vmatprep.subr.bf16.mxu0 0
        %1956 = vmatpush1.bf16.msra.mxu0 0
        %1957 = vmatprep.subr.bf16.mxu0 0
        %1958 = vmatpush1.bf16.msra.mxu0 0
        %1959 = vmatprep.subr.bf16.mxu0 %v1938
        %1960 = vmatpush1.bf16.msra.mxu0 %v1937
        %1961 = vmatprep.subr.bf16.mxu0 0
        %1962 = vmatpush2.bf16.msra.mxu0 0
        %1963 = vmatprep.subr.bf16.mxu0 0
        %1964 = vmatpush2.bf16.msra.mxu0 0
        %1965 = vmatprep.subr.bf16.mxu0 0
        %1966 = vmatpush2.bf16.msra.mxu0 0
        %1967 = vmatprep.subr.bf16.mxu0 0
        %1968 = vmatpush2.bf16.msra.mxu0 0
        %1969 = vmatprep.subr.bf16.mxu0 0
        %1970 = vmatpush2.bf16.msra.mxu0 0
        %1971 = vmatprep.subr.bf16.mxu0 0
        %1972 = vmatpush2.bf16.msra.mxu0 0
        %1973 = vmatprep.subr.bf16.mxu0 0
        %1974 = vmatpush2.bf16.msra.mxu0 0
        %1975 = vmatprep.subr.bf16.mxu0 0
        %1976 = vmatpush2.bf16.msra.mxu0 0
        %1977 = vmatprep.mubr.bf16.mxu0 0
        %1978 = vmatmul.mubr.bf16.gmra.mxu0 %v1943
        %v1979 = vpop.f32.mrf.mxu0
        %v1980 = vadd.f32 %v1929, %v1979
        %v1981 = vpop.f32.mrf.mxu0
        %v1982 = vadd.f32 %v1929, %v1981
        %v1983 = vpop.f32.mrf.mxu0
        %v1984 = vpop.f32.mrf.mxu0
        %1985 = vdwg.mxu0
        %v1986 = vadd.f32 %v1980, %v411
        %v1987 = vadd.f32 %v1982, %v412
        %1988 = vst [vmem:[%s271] sm:$0xff] %v1986
        %1989 = vst [vmem:[%s271 + $0x8] sm:$0xff] %v1987
        %s1990 = sand.u32 %s174, 1
        %s1991 = scalar_lea.sflag [#allocation6], %s1990
        %s1992 = sand.u32 %s174, 1
        %s1993 = smul.addr %s1992, 16
        %s1994 = scalar_lea.vmem [#allocation7], %s1993
        // Predicated region
        $region53: #{tpu_custom_call.1} parent=43 // pred_check
          %p1995 = pneg %p184
        $region54: #{tpu_custom_call.1} parent=43 // pred_check_branch
          %1997 = sbr.rel (%p1995) target = $region56
        $region55: #{tpu_custom_call.1} parent=43 // pred_region
          %s1998 = smul.u32 2, %s26
          %s2000 = ssub.s32 256, 256
          %2001 = vsyncadd %s1991, %s2000
          %s2002 = smul.addr %s25, 2
          %s2003 = sadd.s32 %s1998, %s2002
          %s2004 = smul.addr %s2003, 128
          %s2005 = scalar_lea.hbm %s6, %s2004
          %s2007 = sshll.u32 %s1994, 4
          %s2008 = int_to_ptr.vmem [resolvable:$true] %s2007
          %2010 = dma.vmem_to_hbm [thread:$0]  %s2008, 256, %s2005, %s1991
        $region56: #{tpu_custom_call.1} parent=43 // pred_fallthru
          _
      $region44: #{tpu_custom_call.1} parent=5 // pred_fallthru
        _
      %p2011 = scmp.le.s32.totalorder 2, %s16
      // Predicated region
      $region57: #{tpu_custom_call.1} parent=5 // pred_check
        %p2012 = pneg %p2011
      $region58: #{tpu_custom_call.1} parent=5 // pred_check_branch
        %2014 = sbr.rel (%p2012) target = $region60
      $region59: #{tpu_custom_call.1} parent=5 // pred_region
        %s2015 = ssub.s32 %s16, 2
        // Predicated region
        $region61: #{tpu_custom_call.1} parent=59 // pred_check
          %p2016 = pneg %p190
        $region62: #{tpu_custom_call.1} parent=59 // pred_check_branch
          %2018 = sbr.rel (%p2016) target = $region64
        $region63: #{tpu_custom_call.1} parent=59 // pred_region
          %s2019 = sand.u32 %s175, 1
          %s2020 = scalar_lea.sflag [#allocation6], %s2019
          %s2021 = sand.u32 %s175, 1
          %s2022 = smul.addr %s2021, 16
          %s2023 = scalar_lea.vmem [#allocation7], %s2022
          %2024 = dma.done %s2020, 256
        $region64: #{tpu_custom_call.1} parent=59 // pred_fallthru
          _
      $region60: #{tpu_custom_call.1} parent=5 // pred_fallthru
        _
    $region6: #{tpu_custom_call.1} parent=1 // loop_footer
      %s20 = sadd.s32 1, %s16
    $region7: #{tpu_custom_call.1} parent=1 // loop_footer_branch
      %15 = sbr.rel target = $region3
    $region8: #{tpu_custom_call.1} parent=1 // loop_exit
      _
    %2025 = vsyncpa [#allocation5], 1
    %s2026 = scalar_lea.sflag [#allocation5], 1
    %2027 = vsyncpa %s2026, 1
    %2028 = vsyncpa [#allocation6], 1
    %s2029 = scalar_lea.sflag [#allocation6], 1
    %2030 = vsyncpa %s2029, 1

</llo_original>
